<compile_context>
chip_gen: v6e
topology: v6e:2x2x1
jax: 0.10.0
libtpu: 0.0.40
codegen_flags: <defaults>
</compile_context>

<pallas_src>
import jax
import jax.numpy as jnp
from jax.experimental import pallas as pl
from jax.experimental.pallas import tpu as pltpu
import numpy as np

LANE = 128      # per-gate lane stride (each gate block padded to one vreg column)
SUBLANE = 8     # sublane alignment for the (padded) batch dimension
OUT_PAD = 128   # lane-dense padding of the FC output


def lstm_fc_kernel(x_ref, wih_ref, whh_ref, b_ref, h0_ref, c0_ref,
                   wfc_ref, bfc_ref, out_ref):
    """Full LSTM recurrence + final FC in one kernel invocation.

    x_ref   : (T*Bp, I)     time-major input, batch padded to Bp (padded rows zero)
    wih_ref : (I, 4*Hp)     input->gate weights, gate order (i, f, o, g);
                            gate g occupies lanes [g*Hp, g*Hp+H), rest zero
    whh_ref : (Hp, 4*Hp)    hidden->gate weights, padded rows/cols zero
    b_ref   : (1, 4*Hp)     bias_ih + bias_hh, padded lanes zero
    h0_ref  : (Bp, Hp)      initial hidden state (padded rows/lanes zero)
    c0_ref  : (Bp, Hp)      initial cell state   (padded rows/lanes zero)
    wfc_ref : (Hp, OUT_PAD) fc weight (rows >= H, cols >= out_features are zero)
    bfc_ref : (1, OUT_PAD)  fc bias   (cols >= out_features are zero)
    out_ref : (Bp, OUT_PAD)
    """
    Bp, Hp = h0_ref.shape
    TB, I = x_ref.shape
    T = TB // Bp

    # Small hoisted constants (a handful of vregs, resident across the loop).
    bias = b_ref[...]                                       # (1, 4*Hp)
    w_rows = [wih_ref[k:k + 1, :] for k in range(I)]        # I x (1, 4*Hp)

    h = h0_ref[...]
    c = c0_ref[...]

    # T is a static Python int -> fully unrolled serial recurrence.
    for t in range(T):
        # Input projection on the VPU: I == 2, so an MXU matmul would be ~all
        # padding.  These VALU ops co-issue with the MXU matmul below.
        x_t = x_ref[t * Bp:(t + 1) * Bp, :]                 # (Bp, I), sublane-aligned
        xw_t = bias
        for k in range(I):
            xw_t = xw_t + x_t[:, k:k + 1] * w_rows[k]       # (Bp, 4*Hp)

        # Hidden projection on the MXU.  whh_ref is read inside the loop so the
        # 128x512 weight streams from VMEM per step instead of living in vregs
        # (avoids a 64-vreg hoist + spills over the unrolled loop).
        gates = xw_t + jnp.dot(h, whh_ref[...],
                               preferred_element_type=jnp.float32)

        # Gate order (i, f, o | g): one sigmoid over three contiguous lane-aligned
        # blocks, one tanh over the last.
        sig = jax.nn.sigmoid(gates[:, :3 * Hp])
        i_g = sig[:, 0 * Hp:1 * Hp]
        f_g = sig[:, 1 * Hp:2 * Hp]
        o_g = sig[:, 2 * Hp:3 * Hp]
        g_g = jnp.tanh(gates[:, 3 * Hp:4 * Hp])

        c = f_g * c + i_g * g_g
        h = o_g * jnp.tanh(c)
        # Padded lanes (>= H) stay exactly zero: zero weights/bias -> gate
        # pre-activations 0 -> i=f=o=0.5, g=tanh(0)=0 -> c_pad = 0.5*0 + 0.5*0 = 0,
        # h_pad = 0.5*tanh(0) = 0.  Padded batch rows are independent and sliced
        # away by the wrapper.

    # Final Linear on the last hidden state.  Output is padded lane-dense so the
    # store is an unmasked vst; the wrapper slices [:B, :out_features].
    # TODO(synk): could also keep W_hh staged in the MXU across steps via
    # pltpu.matmul_push_rhs/matmul_acc_lhs/matmul_pop; kept jnp.dot for safety.
    out_ref[...] = (jnp.dot(h, wfc_ref[...], preferred_element_type=jnp.float32)
                    + bfc_ref[...])


class RNN2Pallas:
    """nn.LSTM(input_size, hidden, 1, batch_first=True) + nn.Linear(hidden, 2).

    Weight re-layout / padding happens once here (host-side numpy); the per-call
    path is a jitted transpose/pad + a single pallas_call.
    """

    def __init__(self, w_ih, w_hh, b_ih, b_hh, w_fc, b_fc):
        w_ih = np.asarray(w_ih, np.float32)
        w_hh = np.asarray(w_hh, np.float32)
        b_ih = np.asarray(b_ih, np.float32)
        b_hh = np.asarray(b_hh, np.float32)
        w_fc = np.asarray(w_fc, np.float32)
        b_fc = np.asarray(b_fc, np.float32)

        self.H = H = w_hh.shape[1]
        self.I = I = w_ih.shape[1]
        self.O = O = w_fc.shape[0]
        self.Hp = Hp = ((H + LANE - 1) // LANE) * LANE

        # PyTorch packs gate rows as (i, f, g, o); repack columns as (i, f, o, g)
        # so the three sigmoid gates form one contiguous lane-aligned slice.
        src_order = (0, 1, 3, 2)
        wih_p = np.zeros((I, 4 * Hp), np.float32)
        whh_p = np.zeros((Hp, 4 * Hp), np.float32)
        b_p = np.zeros((1, 4 * Hp), np.float32)
        b_comb = b_ih + b_hh
        for dst, src in enumerate(src_order):
            wih_p[:, dst * Hp:dst * Hp + H] = w_ih[src * H:(src + 1) * H, :].T
            whh_p[:H, dst * Hp:dst * Hp + H] = w_hh[src * H:(src + 1) * H, :].T
            b_p[0, dst * Hp:dst * Hp + H] = b_comb[src * H:(src + 1) * H]

        wfc_p = np.zeros((Hp, OUT_PAD), np.float32)
        wfc_p[:H, :O] = w_fc.T
        bfc_p = np.zeros((1, OUT_PAD), np.float32)
        bfc_p[0, :O] = b_fc

        self._wih = jnp.asarray(wih_p)
        self._whh = jnp.asarray(whh_p)
        self._b = jnp.asarray(b_p)
        self._wfc = jnp.asarray(wfc_p)
        self._bfc = jnp.asarray(bfc_p)

        self._fwd = jax.jit(self._forward)

    def _forward(self, x, h0, c0):
        B, T, _ = x.shape
        Hp = self.Hp
        Bp = max(SUBLANE, ((B + SUBLANE - 1) // SUBLANE) * SUBLANE)

        # Time-major, batch padded to a sublane multiple (padded rows are zero and
        # fully independent of the real rows; sliced away at the end).
        x_tm = jnp.transpose(x.astype(jnp.float32), (1, 0, 2))          # (T, B, I)
        x_p = jnp.zeros((T, Bp, self.I), jnp.float32).at[:, :B, :].set(x_tm)
        x_p = x_p.reshape(T * Bp, self.I)

        h0_p = jnp.zeros((Bp, Hp), jnp.float32).at[:B, :self.H].set(h0)
        c0_p = jnp.zeros((Bp, Hp), jnp.float32).at[:B, :self.H].set(c0)

        vmem = pl.BlockSpec(memory_space=pltpu.MemorySpace.VMEM)
        out = pl.pallas_call(
            lstm_fc_kernel,
            out_shape=jax.ShapeDtypeStruct((Bp, OUT_PAD), jnp.float32),
            in_specs=[vmem] * 8,
            out_specs=vmem,
        )(x_p, self._wih, self._whh, self._b, h0_p, c0_p, self._wfc, self._bfc)
        return out[:B, :self.O]

    def __call__(self, x, h0, c0):
        return self._fwd(x, h0, c0)


def reference_forward(x, w_ih, w_hh, b_ih, b_hh, h0, c0, w_fc, b_fc):
    """Pure-JAX reference mirroring nn.LSTM(batch_first=True) + fc (full-f32 dots)."""
    HIGH = jax.lax.Precision.HIGHEST
    B, T, _ = x.shape
    H = h0.shape[1]
    h, c = h0, c0
    for t in range(T):
        x_t = x[:, t, :]
        gates = (jnp.dot(x_t, w_ih.T, precision=HIGH) + b_ih
                 + jnp.dot(h, w_hh.T, precision=HIGH) + b_hh)
        i_g = jax.nn.sigmoid(gates[:, 0:H])
        f_g = jax.nn.sigmoid(gates[:, H:2 * H])
        g_g = jnp.tanh(gates[:, 2 * H:3 * H])
        o_g = jax.nn.sigmoid(gates[:, 3 * H:4 * H])
        c = f_g * c + i_g * g_g
        h = o_g * jnp.tanh(c)
    return jnp.dot(h, w_fc.T, precision=HIGH) + b_fc


if __name__ == "__main__":
    # Module config: input_size=2, hidden_size=10, num_layers=1, unidirectional.
    B, T, I, H = 2, 8, 2, 10

    key = jax.random.PRNGKey(0)
    keys = jax.random.split(key, 10)

    # Deterministic parameter init (PyTorch default: U(-1/sqrt(H), 1/sqrt(H))).
    k = 1.0 / np.sqrt(H)
    w_ih = jax.random.uniform(keys[0], (4 * H, I), jnp.float32, -k, k)
    w_hh = jax.random.uniform(keys[1], (4 * H, H), jnp.float32, -k, k)
    b_ih = jax.random.uniform(keys[2], (4 * H,), jnp.float32, -k, k)
    b_hh = jax.random.uniform(keys[3], (4 * H,), jnp.float32, -k, k)
    w_fc = jax.random.uniform(keys[4], (2, H), jnp.float32, -k, k)
    b_fc = jax.random.uniform(keys[5], (2,), jnp.float32, -k, k)

    # The PyTorch module draws h0/c0 ~ randn each forward; drawn here
    # deterministically from the same PRNG key and passed in explicitly.
    h0 = jax.random.normal(keys[6], (B, H), jnp.float32)
    c0 = jax.random.normal(keys[7], (B, H), jnp.float32)

    # Input x: (B, T, I) batch-first, matching nn.LSTM(batch_first=True).
    x = jax.random.normal(keys[8], (B, T, I), jnp.float32)

    model = RNN2Pallas(w_ih, w_hh, b_ih, b_hh, w_fc, b_fc)
    out = jax.block_until_ready(model(x, h0, c0))

    ref = reference_forward(x, w_ih, w_hh, b_ih, b_hh, h0, c0, w_fc, b_fc)
    np.testing.assert_allclose(np.asarray(out), np.asarray(ref),
                               rtol=1e-5, atol=1e-5)
    print("KERNEL_OK")
</pallas_src>

<mosaic_0001>
module attributes {stable_mosaic.version = 11 : i64} {
  func.func @lstm_fc_kernel(%arg0: memref<64x2xf32, #tpu.memory_space<vmem>>, %arg1: memref<2x512xf32, #tpu.memory_space<vmem>>, %arg2: memref<128x512xf32, #tpu.memory_space<vmem>>, %arg3: memref<1x512xf32, #tpu.memory_space<vmem>>, %arg4: memref<8x128xf32, #tpu.memory_space<vmem>>, %arg5: memref<8x128xf32, #tpu.memory_space<vmem>>, %arg6: memref<128x128xf32, #tpu.memory_space<vmem>>, %arg7: memref<1x128xf32, #tpu.memory_space<vmem>>, %arg8: memref<8x128xf32, #tpu.memory_space<vmem>>) attributes {dimension_semantics = [], scalar_prefetch = 0 : i64, scratch_operands = 0 : i64, tpu.core_type = #tpu.core_type<tc>} {
    %c0 = arith.constant 0 : index
    %c0_0 = arith.constant 0 : index
    %0 = vector.load %arg3[%c0, %c0_0] : memref<1x512xf32, #tpu.memory_space<vmem>>, vector<1x512xf32>
    %c0_1 = arith.constant 0 : index
    %c0_2 = arith.constant 0 : index
    %1 = vector.load %arg1[%c0_1, %c0_2] : memref<2x512xf32, #tpu.memory_space<vmem>>, vector<1x512xf32>
    %c1 = arith.constant 1 : index
    %c0_3 = arith.constant 0 : index
    %2 = vector.load %arg1[%c1, %c0_3] : memref<2x512xf32, #tpu.memory_space<vmem>>, vector<1x512xf32>
    %c0_4 = arith.constant 0 : index
    %c0_5 = arith.constant 0 : index
    %3 = vector.load %arg4[%c0_4, %c0_5] : memref<8x128xf32, #tpu.memory_space<vmem>>, vector<8x128xf32>
    %c0_6 = arith.constant 0 : index
    %c0_7 = arith.constant 0 : index
    %4 = vector.load %arg5[%c0_6, %c0_7] : memref<8x128xf32, #tpu.memory_space<vmem>>, vector<8x128xf32>
    %c0_8 = arith.constant 0 : index
    %c0_9 = arith.constant 0 : index
    %5 = vector.load %arg0[%c0_8, %c0_9] : memref<64x2xf32, #tpu.memory_space<vmem>>, vector<8x2xf32>
    %6 = vector.extract_strided_slice %5 {offsets = [0, 0], sizes = [8, 1], strides = [1, 1]} : vector<8x2xf32> to vector<8x1xf32>
    %7 = vector.broadcast %6 : vector<8x1xf32> to vector<8x512xf32>
    %8 = vector.broadcast %1 : vector<1x512xf32> to vector<8x512xf32>
    %9 = arith.mulf %7, %8 : vector<8x512xf32>
    %10 = vector.broadcast %0 : vector<1x512xf32> to vector<8x512xf32>
    %11 = arith.addf %10, %9 : vector<8x512xf32>
    %12 = vector.extract_strided_slice %5 {offsets = [0, 1], sizes = [8, 1], strides = [1, 1]} : vector<8x2xf32> to vector<8x1xf32>
    %13 = vector.broadcast %12 : vector<8x1xf32> to vector<8x512xf32>
    %14 = vector.broadcast %2 : vector<1x512xf32> to vector<8x512xf32>
    %15 = arith.mulf %13, %14 : vector<8x512xf32>
    %16 = arith.addf %11, %15 : vector<8x512xf32>
    %c0_10 = arith.constant 0 : index
    %c0_11 = arith.constant 0 : index
    %17 = vector.load %arg2[%c0_10, %c0_11] : memref<128x512xf32, #tpu.memory_space<vmem>>, vector<128x512xf32>
    %cst = arith.constant dense<0.000000e+00> : vector<8x512xf32>
    %18 = tpu.matmul %3, %17, %cst {dimension_numbers = #tpu.dot_dimension_numbers<[1], [0], [0], [1], [0, 0, 1, 1], [], []>} : vector<8x128xf32>, vector<128x512xf32>, vector<8x512xf32> -> vector<8x512xf32>
    %19 = arith.addf %16, %18 : vector<8x512xf32>
    %20 = vector.extract_strided_slice %19 {offsets = [0, 0], sizes = [8, 384], strides = [1, 1]} : vector<8x512xf32> to vector<8x384xf32>
    %21 = arith.negf %20 : vector<8x384xf32>
    %22 = math.exp %21 : vector<8x384xf32>
    %cst_12 = arith.constant 1.000000e+00 : f32
    %23 = vector.broadcast %cst_12 : f32 to vector<8x384xf32>
    %24 = arith.addf %23, %22 : vector<8x384xf32>
    %25 = arith.divf %23, %24 : vector<8x384xf32>
    %26 = vector.extract_strided_slice %25 {offsets = [0, 0], sizes = [8, 128], strides = [1, 1]} : vector<8x384xf32> to vector<8x128xf32>
    %27 = vector.extract_strided_slice %25 {offsets = [0, 128], sizes = [8, 128], strides = [1, 1]} : vector<8x384xf32> to vector<8x128xf32>
    %28 = vector.extract_strided_slice %25 {offsets = [0, 256], sizes = [8, 128], strides = [1, 1]} : vector<8x384xf32> to vector<8x128xf32>
    %29 = vector.extract_strided_slice %19 {offsets = [0, 384], sizes = [8, 128], strides = [1, 1]} : vector<8x512xf32> to vector<8x128xf32>
    %30 = math.tanh %29 : vector<8x128xf32>
    %31 = arith.mulf %27, %4 : vector<8x128xf32>
    %32 = arith.mulf %26, %30 : vector<8x128xf32>
    %33 = arith.addf %31, %32 : vector<8x128xf32>
    %34 = math.tanh %33 : vector<8x128xf32>
    %35 = arith.mulf %28, %34 : vector<8x128xf32>
    %c8 = arith.constant 8 : index
    %c0_13 = arith.constant 0 : index
    %36 = vector.load %arg0[%c8, %c0_13] : memref<64x2xf32, #tpu.memory_space<vmem>>, vector<8x2xf32>
    %37 = vector.extract_strided_slice %36 {offsets = [0, 0], sizes = [8, 1], strides = [1, 1]} : vector<8x2xf32> to vector<8x1xf32>
    %38 = vector.broadcast %37 : vector<8x1xf32> to vector<8x512xf32>
    %39 = vector.broadcast %1 : vector<1x512xf32> to vector<8x512xf32>
    %40 = arith.mulf %38, %39 : vector<8x512xf32>
    %41 = vector.broadcast %0 : vector<1x512xf32> to vector<8x512xf32>
    %42 = arith.addf %41, %40 : vector<8x512xf32>
    %43 = vector.extract_strided_slice %36 {offsets = [0, 1], sizes = [8, 1], strides = [1, 1]} : vector<8x2xf32> to vector<8x1xf32>
    %44 = vector.broadcast %43 : vector<8x1xf32> to vector<8x512xf32>
    %45 = vector.broadcast %2 : vector<1x512xf32> to vector<8x512xf32>
    %46 = arith.mulf %44, %45 : vector<8x512xf32>
    %47 = arith.addf %42, %46 : vector<8x512xf32>
    %c0_14 = arith.constant 0 : index
    %c0_15 = arith.constant 0 : index
    %48 = vector.load %arg2[%c0_14, %c0_15] : memref<128x512xf32, #tpu.memory_space<vmem>>, vector<128x512xf32>
    %cst_16 = arith.constant dense<0.000000e+00> : vector<8x512xf32>
    %49 = tpu.matmul %35, %48, %cst_16 {dimension_numbers = #tpu.dot_dimension_numbers<[1], [0], [0], [1], [0, 0, 1, 1], [], []>} : vector<8x128xf32>, vector<128x512xf32>, vector<8x512xf32> -> vector<8x512xf32>
    %50 = arith.addf %47, %49 : vector<8x512xf32>
    %51 = vector.extract_strided_slice %50 {offsets = [0, 0], sizes = [8, 384], strides = [1, 1]} : vector<8x512xf32> to vector<8x384xf32>
    %52 = arith.negf %51 : vector<8x384xf32>
    %53 = math.exp %52 : vector<8x384xf32>
    %cst_17 = arith.constant 1.000000e+00 : f32
    %54 = vector.broadcast %cst_17 : f32 to vector<8x384xf32>
    %55 = arith.addf %54, %53 : vector<8x384xf32>
    %56 = arith.divf %54, %55 : vector<8x384xf32>
    %57 = vector.extract_strided_slice %56 {offsets = [0, 0], sizes = [8, 128], strides = [1, 1]} : vector<8x384xf32> to vector<8x128xf32>
    %58 = vector.extract_strided_slice %56 {offsets = [0, 128], sizes = [8, 128], strides = [1, 1]} : vector<8x384xf32> to vector<8x128xf32>
    %59 = vector.extract_strided_slice %56 {offsets = [0, 256], sizes = [8, 128], strides = [1, 1]} : vector<8x384xf32> to vector<8x128xf32>
    %60 = vector.extract_strided_slice %50 {offsets = [0, 384], sizes = [8, 128], strides = [1, 1]} : vector<8x512xf32> to vector<8x128xf32>
    %61 = math.tanh %60 : vector<8x128xf32>
    %62 = arith.mulf %58, %33 : vector<8x128xf32>
    %63 = arith.mulf %57, %61 : vector<8x128xf32>
    %64 = arith.addf %62, %63 : vector<8x128xf32>
    %65 = math.tanh %64 : vector<8x128xf32>
    %66 = arith.mulf %59, %65 : vector<8x128xf32>
    %c16 = arith.constant 16 : index
    %c0_18 = arith.constant 0 : index
    %67 = vector.load %arg0[%c16, %c0_18] : memref<64x2xf32, #tpu.memory_space<vmem>>, vector<8x2xf32>
    %68 = vector.extract_strided_slice %67 {offsets = [0, 0], sizes = [8, 1], strides = [1, 1]} : vector<8x2xf32> to vector<8x1xf32>
    %69 = vector.broadcast %68 : vector<8x1xf32> to vector<8x512xf32>
    %70 = vector.broadcast %1 : vector<1x512xf32> to vector<8x512xf32>
    %71 = arith.mulf %69, %70 : vector<8x512xf32>
    %72 = vector.broadcast %0 : vector<1x512xf32> to vector<8x512xf32>
    %73 = arith.addf %72, %71 : vector<8x512xf32>
    %74 = vector.extract_strided_slice %67 {offsets = [0, 1], sizes = [8, 1], strides = [1, 1]} : vector<8x2xf32> to vector<8x1xf32>
    %75 = vector.broadcast %74 : vector<8x1xf32> to vector<8x512xf32>
    %76 = vector.broadcast %2 : vector<1x512xf32> to vector<8x512xf32>
    %77 = arith.mulf %75, %76 : vector<8x512xf32>
    %78 = arith.addf %73, %77 : vector<8x512xf32>
    %c0_19 = arith.constant 0 : index
    %c0_20 = arith.constant 0 : index
    %79 = vector.load %arg2[%c0_19, %c0_20] : memref<128x512xf32, #tpu.memory_space<vmem>>, vector<128x512xf32>
    %cst_21 = arith.constant dense<0.000000e+00> : vector<8x512xf32>
    %80 = tpu.matmul %66, %79, %cst_21 {dimension_numbers = #tpu.dot_dimension_numbers<[1], [0], [0], [1], [0, 0, 1, 1], [], []>} : vector<8x128xf32>, vector<128x512xf32>, vector<8x512xf32> -> vector<8x512xf32>
    %81 = arith.addf %78, %80 : vector<8x512xf32>
    %82 = vector.extract_strided_slice %81 {offsets = [0, 0], sizes = [8, 384], strides = [1, 1]} : vector<8x512xf32> to vector<8x384xf32>
    %83 = arith.negf %82 : vector<8x384xf32>
    %84 = math.exp %83 : vector<8x384xf32>
    %cst_22 = arith.constant 1.000000e+00 : f32
    %85 = vector.broadcast %cst_22 : f32 to vector<8x384xf32>
    %86 = arith.addf %85, %84 : vector<8x384xf32>
    %87 = arith.divf %85, %86 : vector<8x384xf32>
    %88 = vector.extract_strided_slice %87 {offsets = [0, 0], sizes = [8, 128], strides = [1, 1]} : vector<8x384xf32> to vector<8x128xf32>
    %89 = vector.extract_strided_slice %87 {offsets = [0, 128], sizes = [8, 128], strides = [1, 1]} : vector<8x384xf32> to vector<8x128xf32>
    %90 = vector.extract_strided_slice %87 {offsets = [0, 256], sizes = [8, 128], strides = [1, 1]} : vector<8x384xf32> to vector<8x128xf32>
    %91 = vector.extract_strided_slice %81 {offsets = [0, 384], sizes = [8, 128], strides = [1, 1]} : vector<8x512xf32> to vector<8x128xf32>
    %92 = math.tanh %91 : vector<8x128xf32>
    %93 = arith.mulf %89, %64 : vector<8x128xf32>
    %94 = arith.mulf %88, %92 : vector<8x128xf32>
    %95 = arith.addf %93, %94 : vector<8x128xf32>
    %96 = math.tanh %95 : vector<8x128xf32>
    %97 = arith.mulf %90, %96 : vector<8x128xf32>
    %c24 = arith.constant 24 : index
    %c0_23 = arith.constant 0 : index
    %98 = vector.load %arg0[%c24, %c0_23] : memref<64x2xf32, #tpu.memory_space<vmem>>, vector<8x2xf32>
    %99 = vector.extract_strided_slice %98 {offsets = [0, 0], sizes = [8, 1], strides = [1, 1]} : vector<8x2xf32> to vector<8x1xf32>
    %100 = vector.broadcast %99 : vector<8x1xf32> to vector<8x512xf32>
    %101 = vector.broadcast %1 : vector<1x512xf32> to vector<8x512xf32>
    %102 = arith.mulf %100, %101 : vector<8x512xf32>
    %103 = vector.broadcast %0 : vector<1x512xf32> to vector<8x512xf32>
    %104 = arith.addf %103, %102 : vector<8x512xf32>
    %105 = vector.extract_strided_slice %98 {offsets = [0, 1], sizes = [8, 1], strides = [1, 1]} : vector<8x2xf32> to vector<8x1xf32>
    %106 = vector.broadcast %105 : vector<8x1xf32> to vector<8x512xf32>
    %107 = vector.broadcast %2 : vector<1x512xf32> to vector<8x512xf32>
    %108 = arith.mulf %106, %107 : vector<8x512xf32>
    %109 = arith.addf %104, %108 : vector<8x512xf32>
    %c0_24 = arith.constant 0 : index
    %c0_25 = arith.constant 0 : index
    %110 = vector.load %arg2[%c0_24, %c0_25] : memref<128x512xf32, #tpu.memory_space<vmem>>, vector<128x512xf32>
    %cst_26 = arith.constant dense<0.000000e+00> : vector<8x512xf32>
    %111 = tpu.matmul %97, %110, %cst_26 {dimension_numbers = #tpu.dot_dimension_numbers<[1], [0], [0], [1], [0, 0, 1, 1], [], []>} : vector<8x128xf32>, vector<128x512xf32>, vector<8x512xf32> -> vector<8x512xf32>
    %112 = arith.addf %109, %111 : vector<8x512xf32>
    %113 = vector.extract_strided_slice %112 {offsets = [0, 0], sizes = [8, 384], strides = [1, 1]} : vector<8x512xf32> to vector<8x384xf32>
    %114 = arith.negf %113 : vector<8x384xf32>
    %115 = math.exp %114 : vector<8x384xf32>
    %cst_27 = arith.constant 1.000000e+00 : f32
    %116 = vector.broadcast %cst_27 : f32 to vector<8x384xf32>
    %117 = arith.addf %116, %115 : vector<8x384xf32>
    %118 = arith.divf %116, %117 : vector<8x384xf32>
    %119 = vector.extract_strided_slice %118 {offsets = [0, 0], sizes = [8, 128], strides = [1, 1]} : vector<8x384xf32> to vector<8x128xf32>
    %120 = vector.extract_strided_slice %118 {offsets = [0, 128], sizes = [8, 128], strides = [1, 1]} : vector<8x384xf32> to vector<8x128xf32>
    %121 = vector.extract_strided_slice %118 {offsets = [0, 256], sizes = [8, 128], strides = [1, 1]} : vector<8x384xf32> to vector<8x128xf32>
    %122 = vector.extract_strided_slice %112 {offsets = [0, 384], sizes = [8, 128], strides = [1, 1]} : vector<8x512xf32> to vector<8x128xf32>
    %123 = math.tanh %122 : vector<8x128xf32>
    %124 = arith.mulf %120, %95 : vector<8x128xf32>
    %125 = arith.mulf %119, %123 : vector<8x128xf32>
    %126 = arith.addf %124, %125 : vector<8x128xf32>
    %127 = math.tanh %126 : vector<8x128xf32>
    %128 = arith.mulf %121, %127 : vector<8x128xf32>
    %c32 = arith.constant 32 : index
    %c0_28 = arith.constant 0 : index
    %129 = vector.load %arg0[%c32, %c0_28] : memref<64x2xf32, #tpu.memory_space<vmem>>, vector<8x2xf32>
    %130 = vector.extract_strided_slice %129 {offsets = [0, 0], sizes = [8, 1], strides = [1, 1]} : vector<8x2xf32> to vector<8x1xf32>
    %131 = vector.broadcast %130 : vector<8x1xf32> to vector<8x512xf32>
    %132 = vector.broadcast %1 : vector<1x512xf32> to vector<8x512xf32>
    %133 = arith.mulf %131, %132 : vector<8x512xf32>
    %134 = vector.broadcast %0 : vector<1x512xf32> to vector<8x512xf32>
    %135 = arith.addf %134, %133 : vector<8x512xf32>
    %136 = vector.extract_strided_slice %129 {offsets = [0, 1], sizes = [8, 1], strides = [1, 1]} : vector<8x2xf32> to vector<8x1xf32>
    %137 = vector.broadcast %136 : vector<8x1xf32> to vector<8x512xf32>
    %138 = vector.broadcast %2 : vector<1x512xf32> to vector<8x512xf32>
    %139 = arith.mulf %137, %138 : vector<8x512xf32>
    %140 = arith.addf %135, %139 : vector<8x512xf32>
    %c0_29 = arith.constant 0 : index
    %c0_30 = arith.constant 0 : index
    %141 = vector.load %arg2[%c0_29, %c0_30] : memref<128x512xf32, #tpu.memory_space<vmem>>, vector<128x512xf32>
    %cst_31 = arith.constant dense<0.000000e+00> : vector<8x512xf32>
    %142 = tpu.matmul %128, %141, %cst_31 {dimension_numbers = #tpu.dot_dimension_numbers<[1], [0], [0], [1], [0, 0, 1, 1], [], []>} : vector<8x128xf32>, vector<128x512xf32>, vector<8x512xf32> -> vector<8x512xf32>
    %143 = arith.addf %140, %142 : vector<8x512xf32>
    %144 = vector.extract_strided_slice %143 {offsets = [0, 0], sizes = [8, 384], strides = [1, 1]} : vector<8x512xf32> to vector<8x384xf32>
    %145 = arith.negf %144 : vector<8x384xf32>
    %146 = math.exp %145 : vector<8x384xf32>
    %cst_32 = arith.constant 1.000000e+00 : f32
    %147 = vector.broadcast %cst_32 : f32 to vector<8x384xf32>
    %148 = arith.addf %147, %146 : vector<8x384xf32>
    %149 = arith.divf %147, %148 : vector<8x384xf32>
    %150 = vector.extract_strided_slice %149 {offsets = [0, 0], sizes = [8, 128], strides = [1, 1]} : vector<8x384xf32> to vector<8x128xf32>
    %151 = vector.extract_strided_slice %149 {offsets = [0, 128], sizes = [8, 128], strides = [1, 1]} : vector<8x384xf32> to vector<8x128xf32>
    %152 = vector.extract_strided_slice %149 {offsets = [0, 256], sizes = [8, 128], strides = [1, 1]} : vector<8x384xf32> to vector<8x128xf32>
    %153 = vector.extract_strided_slice %143 {offsets = [0, 384], sizes = [8, 128], strides = [1, 1]} : vector<8x512xf32> to vector<8x128xf32>
    %154 = math.tanh %153 : vector<8x128xf32>
    %155 = arith.mulf %151, %126 : vector<8x128xf32>
    %156 = arith.mulf %150, %154 : vector<8x128xf32>
    %157 = arith.addf %155, %156 : vector<8x128xf32>
    %158 = math.tanh %157 : vector<8x128xf32>
    %159 = arith.mulf %152, %158 : vector<8x128xf32>
    %c40 = arith.constant 40 : index
    %c0_33 = arith.constant 0 : index
    %160 = vector.load %arg0[%c40, %c0_33] : memref<64x2xf32, #tpu.memory_space<vmem>>, vector<8x2xf32>
    %161 = vector.extract_strided_slice %160 {offsets = [0, 0], sizes = [8, 1], strides = [1, 1]} : vector<8x2xf32> to vector<8x1xf32>
    %162 = vector.broadcast %161 : vector<8x1xf32> to vector<8x512xf32>
    %163 = vector.broadcast %1 : vector<1x512xf32> to vector<8x512xf32>
    %164 = arith.mulf %162, %163 : vector<8x512xf32>
    %165 = vector.broadcast %0 : vector<1x512xf32> to vector<8x512xf32>
    %166 = arith.addf %165, %164 : vector<8x512xf32>
    %167 = vector.extract_strided_slice %160 {offsets = [0, 1], sizes = [8, 1], strides = [1, 1]} : vector<8x2xf32> to vector<8x1xf32>
    %168 = vector.broadcast %167 : vector<8x1xf32> to vector<8x512xf32>
    %169 = vector.broadcast %2 : vector<1x512xf32> to vector<8x512xf32>
    %170 = arith.mulf %168, %169 : vector<8x512xf32>
    %171 = arith.addf %166, %170 : vector<8x512xf32>
    %c0_34 = arith.constant 0 : index
    %c0_35 = arith.constant 0 : index
    %172 = vector.load %arg2[%c0_34, %c0_35] : memref<128x512xf32, #tpu.memory_space<vmem>>, vector<128x512xf32>
    %cst_36 = arith.constant dense<0.000000e+00> : vector<8x512xf32>
    %173 = tpu.matmul %159, %172, %cst_36 {dimension_numbers = #tpu.dot_dimension_numbers<[1], [0], [0], [1], [0, 0, 1, 1], [], []>} : vector<8x128xf32>, vector<128x512xf32>, vector<8x512xf32> -> vector<8x512xf32>
    %174 = arith.addf %171, %173 : vector<8x512xf32>
    %175 = vector.extract_strided_slice %174 {offsets = [0, 0], sizes = [8, 384], strides = [1, 1]} : vector<8x512xf32> to vector<8x384xf32>
    %176 = arith.negf %175 : vector<8x384xf32>
    %177 = math.exp %176 : vector<8x384xf32>
    %cst_37 = arith.constant 1.000000e+00 : f32
    %178 = vector.broadcast %cst_37 : f32 to vector<8x384xf32>
    %179 = arith.addf %178, %177 : vector<8x384xf32>
    %180 = arith.divf %178, %179 : vector<8x384xf32>
    %181 = vector.extract_strided_slice %180 {offsets = [0, 0], sizes = [8, 128], strides = [1, 1]} : vector<8x384xf32> to vector<8x128xf32>
    %182 = vector.extract_strided_slice %180 {offsets = [0, 128], sizes = [8, 128], strides = [1, 1]} : vector<8x384xf32> to vector<8x128xf32>
    %183 = vector.extract_strided_slice %180 {offsets = [0, 256], sizes = [8, 128], strides = [1, 1]} : vector<8x384xf32> to vector<8x128xf32>
    %184 = vector.extract_strided_slice %174 {offsets = [0, 384], sizes = [8, 128], strides = [1, 1]} : vector<8x512xf32> to vector<8x128xf32>
    %185 = math.tanh %184 : vector<8x128xf32>
    %186 = arith.mulf %182, %157 : vector<8x128xf32>
    %187 = arith.mulf %181, %185 : vector<8x128xf32>
    %188 = arith.addf %186, %187 : vector<8x128xf32>
    %189 = math.tanh %188 : vector<8x128xf32>
    %190 = arith.mulf %183, %189 : vector<8x128xf32>
    %c48 = arith.constant 48 : index
    %c0_38 = arith.constant 0 : index
    %191 = vector.load %arg0[%c48, %c0_38] : memref<64x2xf32, #tpu.memory_space<vmem>>, vector<8x2xf32>
    %192 = vector.extract_strided_slice %191 {offsets = [0, 0], sizes = [8, 1], strides = [1, 1]} : vector<8x2xf32> to vector<8x1xf32>
    %193 = vector.broadcast %192 : vector<8x1xf32> to vector<8x512xf32>
    %194 = vector.broadcast %1 : vector<1x512xf32> to vector<8x512xf32>
    %195 = arith.mulf %193, %194 : vector<8x512xf32>
    %196 = vector.broadcast %0 : vector<1x512xf32> to vector<8x512xf32>
    %197 = arith.addf %196, %195 : vector<8x512xf32>
    %198 = vector.extract_strided_slice %191 {offsets = [0, 1], sizes = [8, 1], strides = [1, 1]} : vector<8x2xf32> to vector<8x1xf32>
    %199 = vector.broadcast %198 : vector<8x1xf32> to vector<8x512xf32>
    %200 = vector.broadcast %2 : vector<1x512xf32> to vector<8x512xf32>
    %201 = arith.mulf %199, %200 : vector<8x512xf32>
    %202 = arith.addf %197, %201 : vector<8x512xf32>
    %c0_39 = arith.constant 0 : index
    %c0_40 = arith.constant 0 : index
    %203 = vector.load %arg2[%c0_39, %c0_40] : memref<128x512xf32, #tpu.memory_space<vmem>>, vector<128x512xf32>
    %cst_41 = arith.constant dense<0.000000e+00> : vector<8x512xf32>
    %204 = tpu.matmul %190, %203, %cst_41 {dimension_numbers = #tpu.dot_dimension_numbers<[1], [0], [0], [1], [0, 0, 1, 1], [], []>} : vector<8x128xf32>, vector<128x512xf32>, vector<8x512xf32> -> vector<8x512xf32>
    %205 = arith.addf %202, %204 : vector<8x512xf32>
    %206 = vector.extract_strided_slice %205 {offsets = [0, 0], sizes = [8, 384], strides = [1, 1]} : vector<8x512xf32> to vector<8x384xf32>
    %207 = arith.negf %206 : vector<8x384xf32>
    %208 = math.exp %207 : vector<8x384xf32>
    %cst_42 = arith.constant 1.000000e+00 : f32
    %209 = vector.broadcast %cst_42 : f32 to vector<8x384xf32>
    %210 = arith.addf %209, %208 : vector<8x384xf32>
    %211 = arith.divf %209, %210 : vector<8x384xf32>
    %212 = vector.extract_strided_slice %211 {offsets = [0, 0], sizes = [8, 128], strides = [1, 1]} : vector<8x384xf32> to vector<8x128xf32>
    %213 = vector.extract_strided_slice %211 {offsets = [0, 128], sizes = [8, 128], strides = [1, 1]} : vector<8x384xf32> to vector<8x128xf32>
    %214 = vector.extract_strided_slice %211 {offsets = [0, 256], sizes = [8, 128], strides = [1, 1]} : vector<8x384xf32> to vector<8x128xf32>
    %215 = vector.extract_strided_slice %205 {offsets = [0, 384], sizes = [8, 128], strides = [1, 1]} : vector<8x512xf32> to vector<8x128xf32>
    %216 = math.tanh %215 : vector<8x128xf32>
    %217 = arith.mulf %213, %188 : vector<8x128xf32>
    %218 = arith.mulf %212, %216 : vector<8x128xf32>
    %219 = arith.addf %217, %218 : vector<8x128xf32>
    %220 = math.tanh %219 : vector<8x128xf32>
    %221 = arith.mulf %214, %220 : vector<8x128xf32>
    %c56 = arith.constant 56 : index
    %c0_43 = arith.constant 0 : index
    %222 = vector.load %arg0[%c56, %c0_43] : memref<64x2xf32, #tpu.memory_space<vmem>>, vector<8x2xf32>
    %223 = vector.extract_strided_slice %222 {offsets = [0, 0], sizes = [8, 1], strides = [1, 1]} : vector<8x2xf32> to vector<8x1xf32>
    %224 = vector.broadcast %223 : vector<8x1xf32> to vector<8x512xf32>
    %225 = vector.broadcast %1 : vector<1x512xf32> to vector<8x512xf32>
    %226 = arith.mulf %224, %225 : vector<8x512xf32>
    %227 = vector.broadcast %0 : vector<1x512xf32> to vector<8x512xf32>
    %228 = arith.addf %227, %226 : vector<8x512xf32>
    %229 = vector.extract_strided_slice %222 {offsets = [0, 1], sizes = [8, 1], strides = [1, 1]} : vector<8x2xf32> to vector<8x1xf32>
    %230 = vector.broadcast %229 : vector<8x1xf32> to vector<8x512xf32>
    %231 = vector.broadcast %2 : vector<1x512xf32> to vector<8x512xf32>
    %232 = arith.mulf %230, %231 : vector<8x512xf32>
    %233 = arith.addf %228, %232 : vector<8x512xf32>
    %c0_44 = arith.constant 0 : index
    %c0_45 = arith.constant 0 : index
    %234 = vector.load %arg2[%c0_44, %c0_45] : memref<128x512xf32, #tpu.memory_space<vmem>>, vector<128x512xf32>
    %cst_46 = arith.constant dense<0.000000e+00> : vector<8x512xf32>
    %235 = tpu.matmul %221, %234, %cst_46 {dimension_numbers = #tpu.dot_dimension_numbers<[1], [0], [0], [1], [0, 0, 1, 1], [], []>} : vector<8x128xf32>, vector<128x512xf32>, vector<8x512xf32> -> vector<8x512xf32>
    %236 = arith.addf %233, %235 : vector<8x512xf32>
    %237 = vector.extract_strided_slice %236 {offsets = [0, 0], sizes = [8, 384], strides = [1, 1]} : vector<8x512xf32> to vector<8x384xf32>
    %238 = arith.negf %237 : vector<8x384xf32>
    %239 = math.exp %238 : vector<8x384xf32>
    %cst_47 = arith.constant 1.000000e+00 : f32
    %240 = vector.broadcast %cst_47 : f32 to vector<8x384xf32>
    %241 = arith.addf %240, %239 : vector<8x384xf32>
    %242 = arith.divf %240, %241 : vector<8x384xf32>
    %243 = vector.extract_strided_slice %242 {offsets = [0, 0], sizes = [8, 128], strides = [1, 1]} : vector<8x384xf32> to vector<8x128xf32>
    %244 = vector.extract_strided_slice %242 {offsets = [0, 128], sizes = [8, 128], strides = [1, 1]} : vector<8x384xf32> to vector<8x128xf32>
    %245 = vector.extract_strided_slice %242 {offsets = [0, 256], sizes = [8, 128], strides = [1, 1]} : vector<8x384xf32> to vector<8x128xf32>
    %246 = vector.extract_strided_slice %236 {offsets = [0, 384], sizes = [8, 128], strides = [1, 1]} : vector<8x512xf32> to vector<8x128xf32>
    %247 = math.tanh %246 : vector<8x128xf32>
    %248 = arith.mulf %244, %219 : vector<8x128xf32>
    %249 = arith.mulf %243, %247 : vector<8x128xf32>
    %250 = arith.addf %248, %249 : vector<8x128xf32>
    %251 = math.tanh %250 : vector<8x128xf32>
    %252 = arith.mulf %245, %251 : vector<8x128xf32>
    %c0_48 = arith.constant 0 : index
    %c0_49 = arith.constant 0 : index
    %253 = vector.load %arg6[%c0_48, %c0_49] : memref<128x128xf32, #tpu.memory_space<vmem>>, vector<128x128xf32>
    %cst_50 = arith.constant dense<0.000000e+00> : vector<8x128xf32>
    %254 = tpu.matmul %252, %253, %cst_50 {dimension_numbers = #tpu.dot_dimension_numbers<[1], [0], [0], [1], [0, 0, 1, 1], [], []>} : vector<8x128xf32>, vector<128x128xf32>, vector<8x128xf32> -> vector<8x128xf32>
    %c0_51 = arith.constant 0 : index
    %c0_52 = arith.constant 0 : index
    %255 = vector.load %arg7[%c0_51, %c0_52] : memref<1x128xf32, #tpu.memory_space<vmem>>, vector<1x128xf32>
    %256 = vector.broadcast %255 : vector<1x128xf32> to vector<8x128xf32>
    %257 = arith.addf %254, %256 : vector<8x128xf32>
    %c0_53 = arith.constant 0 : index
    %c0_54 = arith.constant 0 : index
    %258 = vector.load %arg8[%c0_53, %c0_54] : memref<8x128xf32, #tpu.memory_space<vmem>>, vector<8x128xf32>
    tpu.vector_store %arg8[%c0_53, %c0_54], %257 {strides = array<i32>} : memref<8x128xf32, #tpu.memory_space<vmem>>, vector<8x128xf32>,
    return
  }
}

</mosaic_0001>

<llo_original>
// kernel: _forward.1
$region0: #{_forward.1}
  #allocation0 [shape = 'u32[]', space=smem, size = 0x4, offset = 0x4, fixed_abs, tag = 'smem constant byte address 0x4 - core index']
  #allocation1 [shape = 'u32[144,128]{1,0:T(1,128)}', space=vmem, size = 0x12000, scoped, tag = 'internal scratch']
  %s0 = inlined_call_operand.vmem [shape: f32[64,2], index: 0, kind: input, shape index: {}]
  %s1 = inlined_call_operand.vmem [shape: f32[2,512], index: 1, kind: input, shape index: {}]
  %s2 = inlined_call_operand.hbm [shape: f32[128,512], index: 2, kind: input, shape index: {}]
  %s3 = inlined_call_operand.hbm [shape: f32[1,512], index: 3, kind: input, shape index: {}]
  %s4 = inlined_call_operand.vmem [shape: f32[8,128], index: 4, kind: input, shape index: {}]
  %s5 = inlined_call_operand.vmem [shape: f32[8,128], index: 5, kind: input, shape index: {}]
  %s6 = inlined_call_operand.vmem [shape: f32[128,128], index: 6, kind: input, shape index: {}]
  %s7 = inlined_call_operand.hbm [shape: f32[1,128], index: 7, kind: input, shape index: {}]
  %s8 = inlined_call_operand.vmem [shape: f32[8,128], index: 8, kind: output, shape index: {}]
  %s9 = sld [smem:[#allocation0]]
  $region54: #{_forward.1} parent=0
    _
  %s11 = ssub.s32 1, %s9
  %s12 = scalar_select 0, %s11, %s9
  $region1: #{_forward.1} parent=0
    #allocation2 [shape = 'u8[262144]{0}', space=vmem, size = 0x40000, scoped, tag = 'input window, operand 2, single buffered']
    #allocation3 [shape = 's32[1]{0}', space=sflag, size = 0x4, scoped, tag = 'scoped memory for _forward.1']
    #allocation4 [shape = 'u8[2048]{0}', space=vmem, size = 0x800, scoped, tag = 'input window, operand 3, single buffered']
    #allocation5 [shape = 's32[1]{0}', space=sflag, size = 0x4, scoped, tag = 'scoped memory for _forward.1']
    #allocation6 [shape = 'u8[512]{0}', space=vmem, size = 0x400, scoped, tag = 'input window, operand 7, single buffered']
    %13 = vsyncpa [#allocation3], 0
    %14 = vsyncpa [#allocation5], 0
    // Predicated region
    $region2: #{_forward.1} parent=1 // pred_check
      _
    $region3: #{_forward.1} parent=1 // pred_check_branch
      %16 = sbr.rel (0) target = $region5
    $region4: #{_forward.1} parent=1 // pred_region
      _
    $region5: #{_forward.1} parent=1 // pred_fallthru
      _
    // Predicated region
    $region6: #{_forward.1} parent=1 // pred_check
      _
    $region7: #{_forward.1} parent=1 // pred_check_branch
      %18 = sbr.rel (0) target = $region9
    $region8: #{_forward.1} parent=1 // pred_region
      _
    $region9: #{_forward.1} parent=1 // pred_fallthru
      _
    // Predicated region
    $region10: #{_forward.1} parent=1 // pred_check
      _
    $region11: #{_forward.1} parent=1 // pred_check_branch
      %20 = sbr.rel (0) target = $region13
    $region12: #{_forward.1} parent=1 // pred_region
      %s22 = ssub.s32 8192, 8192
      %23 = vsyncadd [#allocation3], %s22
      %s24 = sshll.u32 [#allocation2], 4
      %s25 = int_to_ptr.vmem [resolvable:$true] %s24
      %30 = dma.hbm_to_vmem [thread:$0]  %s2, 8192, %s25, [#allocation3], 512, 512, 32
    $region13: #{_forward.1} parent=1 // pred_fallthru
      _
    // Predicated region
    $region14: #{_forward.1} parent=1 // pred_check
      _
    $region15: #{_forward.1} parent=1 // pred_check_branch
      %32 = sbr.rel (0) target = $region17
    $region16: #{_forward.1} parent=1 // pred_region
      %s34 = ssub.s32 64, 64
      %35 = vsyncadd [#allocation5], %s34
      %s37 = sshll.u32 [#allocation4], 4
      %s38 = int_to_ptr.vmem [resolvable:$true] %s37
      %40 = dma.hbm_to_vmem [thread:$0]  %s3, 64, %s38, [#allocation5]
    $region17: #{_forward.1} parent=1 // pred_fallthru
      _
    // Predicated region
    $region18: #{_forward.1} parent=1 // pred_check
      _
    $region19: #{_forward.1} parent=1 // pred_check_branch
      %42 = sbr.rel (0) target = $region21
    $region20: #{_forward.1} parent=1 // pred_region
      _
    $region21: #{_forward.1} parent=1 // pred_fallthru
      _
    // Predicated region
    $region22: #{_forward.1} parent=1 // pred_check
      _
    $region23: #{_forward.1} parent=1 // pred_check_branch
      %44 = sbr.rel (0) target = $region25
    $region24: #{_forward.1} parent=1 // pred_region
      _
    $region25: #{_forward.1} parent=1 // pred_fallthru
      _
    // Predicated region
    $region26: #{_forward.1} parent=1 // pred_check
      _
    $region27: #{_forward.1} parent=1 // pred_check_branch
      %46 = sbr.rel (0) target = $region29
    $region28: #{_forward.1} parent=1 // pred_region
      _
    $region29: #{_forward.1} parent=1 // pred_fallthru
      _
    // Predicated region
    $region30: #{_forward.1} parent=1 // pred_check
      _
    $region31: #{_forward.1} parent=1 // pred_check_branch
      %48 = sbr.rel (0) target = $region33
    $region32: #{_forward.1} parent=1 // pred_region
      %s50 = ssub.s32 16, 16
      %51 = vsyncadd [#allocation5], %s50
      %s53 = sshll.u32 [#allocation6], 4
      %s54 = int_to_ptr.vmem [resolvable:$true] %s53
      %56 = dma.hbm_to_vmem [thread:$0]  %s7, 16, %s54, [#allocation5]
    $region33: #{_forward.1} parent=1 // pred_fallthru
      _
    // Predicated region
    $region34: #{_forward.1} parent=1 // pred_check
      _
    $region35: #{_forward.1} parent=1 // pred_check_branch
      %58 = sbr.rel (0) target = $region37
    $region36: #{_forward.1} parent=1 // pred_region
      %59 = dma.done [#allocation3], 8192
    $region37: #{_forward.1} parent=1 // pred_fallthru
      _
    // Predicated region
    $region38: #{_forward.1} parent=1 // pred_check
      _
    $region39: #{_forward.1} parent=1 // pred_check_branch
      %61 = sbr.rel (0) target = $region41
    $region40: #{_forward.1} parent=1 // pred_region
      %62 = dma.done [#allocation5], 64
    $region41: #{_forward.1} parent=1 // pred_fallthru
      _
    // Predicated region
    $region42: #{_forward.1} parent=1 // pred_check
      _
    $region43: #{_forward.1} parent=1 // pred_check_branch
      %64 = sbr.rel (0) target = $region45
    $region44: #{_forward.1} parent=1 // pred_region
      %65 = dma.done [#allocation5], 16
    $region45: #{_forward.1} parent=1 // pred_fallthru
      _
    %v66 = vld [vmem:[#allocation4] sm:$0xf]
    %v67 = vld [vmem:[%s1] ss:$2 sm:$0xf]
    %s68 = scalar_lea.vmem %s1, 1
    %v69 = vld [vmem:[%s68] ss:$2 sm:$0xf]
    %v70 = vld [vmem:[%s4] sm:$0xff]
    %v71 = vld [vmem:[%s5] sm:$0xff]
    %v72 = vld [vmem:[%s0] sm:$0xff]
    %74 = vset.pattern.permute.xlu0 0
    %75 = vperm.xlu0 %74, %v72
    %v76 = vpop.permute.xlu0 %75
    %v79 = vlaneseq
    %v80 = vshrl.u32 %v79, 7
    %v81 = vsub.s32 0, %v80
    %v82 = vrot.slane %v67, %v81
    %v83 = vlaneseq
    %v84 = vshrl.u32 %v83, 7
    %v85 = vsub.s32 1, %v84
    %v86 = vrot.slane %v67, %v85
    %v87 = vlaneseq
    %v88 = vshrl.u32 %v87, 7
    %v89 = vsub.s32 2, %v88
    %v90 = vrot.slane %v67, %v89
    %v91 = vlaneseq
    %v92 = vshrl.u32 %v91, 7
    %v93 = vsub.s32 3, %v92
    %v94 = vrot.slane %v67, %v93
    %v99 = vmul.f32 %v76, %v82
    %v100 = vmul.f32 %v76, %v86
    %v101 = vmul.f32 %v76, %v90
    %v102 = vmul.f32 %v76, %v94
    %v104 = vlaneseq
    %v105 = vshrl.u32 %v104, 7
    %v106 = vsub.s32 0, %v105
    %v107 = vrot.slane %v66, %v106
    %v108 = vlaneseq
    %v109 = vshrl.u32 %v108, 7
    %v110 = vsub.s32 1, %v109
    %v111 = vrot.slane %v66, %v110
    %v112 = vlaneseq
    %v113 = vshrl.u32 %v112, 7
    %v114 = vsub.s32 2, %v113
    %v115 = vrot.slane %v66, %v114
    %v116 = vlaneseq
    %v117 = vshrl.u32 %v116, 7
    %v118 = vsub.s32 3, %v117
    %v119 = vrot.slane %v66, %v118
    %v124 = vadd.f32 %v107, %v99
    %v125 = vadd.f32 %v111, %v100
    %v126 = vadd.f32 %v115, %v101
    %v127 = vadd.f32 %v119, %v102
    %128 = vset.pattern.permute.xlu0 1
    %129 = vperm.xlu0 %128, %v72
    %v130 = vpop.permute.xlu0 %129
    %v133 = vlaneseq
    %v134 = vshrl.u32 %v133, 7
    %v135 = vsub.s32 0, %v134
    %v136 = vrot.slane %v69, %v135
    %v137 = vlaneseq
    %v138 = vshrl.u32 %v137, 7
    %v139 = vsub.s32 1, %v138
    %v140 = vrot.slane %v69, %v139
    %v141 = vlaneseq
    %v142 = vshrl.u32 %v141, 7
    %v143 = vsub.s32 2, %v142
    %v144 = vrot.slane %v69, %v143
    %v145 = vlaneseq
    %v146 = vshrl.u32 %v145, 7
    %v147 = vsub.s32 3, %v146
    %v148 = vrot.slane %v69, %v147
    %v153 = vmul.f32 %v130, %v136
    %v154 = vmul.f32 %v130, %v140
    %v155 = vmul.f32 %v130, %v144
    %v156 = vmul.f32 %v130, %v148
    %v157 = vadd.f32 %v124, %v153
    %v158 = vadd.f32 %v125, %v154
    %v159 = vadd.f32 %v126, %v155
    %v160 = vadd.f32 %v127, %v156
    %v161 = vld [vmem:[#allocation2] sm:$0xff]
    %v162 = vld [vmem:[#allocation2 + $0x8] sm:$0xff]
    %v163 = vld [vmem:[#allocation2 + $0x10] sm:$0xff]
    %v164 = vld [vmem:[#allocation2 + $0x18] sm:$0xff]
    %v165 = vld [vmem:[#allocation2 + $0x20] sm:$0xff]
    %v166 = vld [vmem:[#allocation2 + $0x28] sm:$0xff]
    %v167 = vld [vmem:[#allocation2 + $0x30] sm:$0xff]
    %v168 = vld [vmem:[#allocation2 + $0x38] sm:$0xff]
    %v169 = vld [vmem:[#allocation2 + $0x40] sm:$0xff]
    %v170 = vld [vmem:[#allocation2 + $0x48] sm:$0xff]
    %v171 = vld [vmem:[#allocation2 + $0x50] sm:$0xff]
    %v172 = vld [vmem:[#allocation2 + $0x58] sm:$0xff]
    %v173 = vld [vmem:[#allocation2 + $0x60] sm:$0xff]
    %v174 = vld [vmem:[#allocation2 + $0x68] sm:$0xff]
    %v175 = vld [vmem:[#allocation2 + $0x70] sm:$0xff]
    %v176 = vld [vmem:[#allocation2 + $0x78] sm:$0xff]
    %v177 = vld [vmem:[#allocation2 + $0x80] sm:$0xff]
    %v178 = vld [vmem:[#allocation2 + $0x88] sm:$0xff]
    %v179 = vld [vmem:[#allocation2 + $0x90] sm:$0xff]
    %v180 = vld [vmem:[#allocation2 + $0x98] sm:$0xff]
    %v181 = vld [vmem:[#allocation2 + $0xa0] sm:$0xff]
    %v182 = vld [vmem:[#allocation2 + $0xa8] sm:$0xff]
    %v183 = vld [vmem:[#allocation2 + $0xb0] sm:$0xff]
    %v184 = vld [vmem:[#allocation2 + $0xb8] sm:$0xff]
    %v185 = vld [vmem:[#allocation2 + $0xc0] sm:$0xff]
    %v186 = vld [vmem:[#allocation2 + $0xc8] sm:$0xff]
    %v187 = vld [vmem:[#allocation2 + $0xd0] sm:$0xff]
    %v188 = vld [vmem:[#allocation2 + $0xd8] sm:$0xff]
    %v189 = vld [vmem:[#allocation2 + $0xe0] sm:$0xff]
    %v190 = vld [vmem:[#allocation2 + $0xe8] sm:$0xff]
    %v191 = vld [vmem:[#allocation2 + $0xf0] sm:$0xff]
    %v192 = vld [vmem:[#allocation2 + $0xf8] sm:$0xff]
    %v193 = vld [vmem:[#allocation2 + $0x100] sm:$0xff]
    %v194 = vld [vmem:[#allocation2 + $0x108] sm:$0xff]
    %v195 = vld [vmem:[#allocation2 + $0x110] sm:$0xff]
    %v196 = vld [vmem:[#allocation2 + $0x118] sm:$0xff]
    %v197 = vld [vmem:[#allocation2 + $0x120] sm:$0xff]
    %v198 = vld [vmem:[#allocation2 + $0x128] sm:$0xff]
    %v199 = vld [vmem:[#allocation2 + $0x130] sm:$0xff]
    %v200 = vld [vmem:[#allocation2 + $0x138] sm:$0xff]
    %v201 = vld [vmem:[#allocation2 + $0x140] sm:$0xff]
    %v202 = vld [vmem:[#allocation2 + $0x148] sm:$0xff]
    %v203 = vld [vmem:[#allocation2 + $0x150] sm:$0xff]
    %v204 = vld [vmem:[#allocation2 + $0x158] sm:$0xff]
    %v205 = vld [vmem:[#allocation2 + $0x160] sm:$0xff]
    %v206 = vld [vmem:[#allocation2 + $0x168] sm:$0xff]
    %v207 = vld [vmem:[#allocation2 + $0x170] sm:$0xff]
    %v208 = vld [vmem:[#allocation2 + $0x178] sm:$0xff]
    %v209 = vld [vmem:[#allocation2 + $0x180] sm:$0xff]
    %v210 = vld [vmem:[#allocation2 + $0x188] sm:$0xff]
    %v211 = vld [vmem:[#allocation2 + $0x190] sm:$0xff]
    %v212 = vld [vmem:[#allocation2 + $0x198] sm:$0xff]
    %v213 = vld [vmem:[#allocation2 + $0x1a0] sm:$0xff]
    %v214 = vld [vmem:[#allocation2 + $0x1a8] sm:$0xff]
    %v215 = vld [vmem:[#allocation2 + $0x1b0] sm:$0xff]
    %v216 = vld [vmem:[#allocation2 + $0x1b8] sm:$0xff]
    %v217 = vld [vmem:[#allocation2 + $0x1c0] sm:$0xff]
    %v218 = vld [vmem:[#allocation2 + $0x1c8] sm:$0xff]
    %v219 = vld [vmem:[#allocation2 + $0x1d0] sm:$0xff]
    %v220 = vld [vmem:[#allocation2 + $0x1d8] sm:$0xff]
    %v221 = vld [vmem:[#allocation2 + $0x1e0] sm:$0xff]
    %v222 = vld [vmem:[#allocation2 + $0x1e8] sm:$0xff]
    %v223 = vld [vmem:[#allocation2 + $0x1f0] sm:$0xff]
    %v224 = vld [vmem:[#allocation2 + $0x1f8] sm:$0xff]
    %225 = vmatprep.subr.mxu0 %v222
    %226 = vmatpush1.msra.mxu0 %v221
    %227 = vmatprep.subr.mxu0 %v218
    %228 = vmatpush1.msra.mxu0 %v217
    %229 = vmatprep.subr.mxu0 %v214
    %230 = vmatpush1.msra.mxu0 %v213
    %231 = vmatprep.subr.mxu0 %v210
    %232 = vmatpush1.msra.mxu0 %v209
    %233 = vmatprep.subr.mxu0 %v206
    %234 = vmatpush1.msra.mxu0 %v205
    %235 = vmatprep.subr.mxu0 %v202
    %236 = vmatpush1.msra.mxu0 %v201
    %237 = vmatprep.subr.mxu0 %v198
    %238 = vmatpush1.msra.mxu0 %v197
    %239 = vmatprep.subr.mxu0 %v194
    %240 = vmatpush1.msra.mxu0 %v193
    %241 = vmatprep.subr.mxu0 %v190
    %242 = vmatpush1.msra.mxu0 %v189
    %243 = vmatprep.subr.mxu0 %v186
    %244 = vmatpush1.msra.mxu0 %v185
    %245 = vmatprep.subr.mxu0 %v182
    %246 = vmatpush1.msra.mxu0 %v181
    %247 = vmatprep.subr.mxu0 %v178
    %248 = vmatpush1.msra.mxu0 %v177
    %249 = vmatprep.subr.mxu0 %v174
    %250 = vmatpush1.msra.mxu0 %v173
    %251 = vmatprep.subr.mxu0 %v170
    %252 = vmatpush1.msra.mxu0 %v169
    %253 = vmatprep.subr.mxu0 %v166
    %254 = vmatpush1.msra.mxu0 %v165
    %255 = vmatprep.subr.mxu0 %v162
    %256 = vmatpush1.msra.mxu0 %v161
    %257 = vmatprep.subr.mxu0 0.0
    %258 = vmatpush2.msra.mxu0 0.0
    %259 = vmatprep.subr.mxu0 0.0
    %260 = vmatpush2.msra.mxu0 0.0
    %261 = vmatprep.subr.mxu0 0.0
    %262 = vmatpush2.msra.mxu0 0.0
    %263 = vmatprep.subr.mxu0 0.0
    %264 = vmatpush2.msra.mxu0 0.0
    %265 = vmatprep.subr.mxu0 0.0
    %266 = vmatpush2.msra.mxu0 0.0
    %267 = vmatprep.subr.mxu0 0.0
    %268 = vmatpush2.msra.mxu0 0.0
    %269 = vmatprep.subr.mxu0 0.0
    %270 = vmatpush2.msra.mxu0 0.0
    %271 = vmatprep.subr.mxu0 0.0
    %272 = vmatpush2.msra.mxu0 0.0
    %273 = vmatprep.subr.mxu0 0.0
    %274 = vmatpush2.msra.mxu0 0.0
    %275 = vmatprep.subr.mxu0 0.0
    %276 = vmatpush2.msra.mxu0 0.0
    %277 = vmatprep.subr.mxu0 0.0
    %278 = vmatpush2.msra.mxu0 0.0
    %279 = vmatprep.subr.mxu0 0.0
    %280 = vmatpush2.msra.mxu0 0.0
    %281 = vmatprep.subr.mxu0 0.0
    %282 = vmatpush2.msra.mxu0 0.0
    %283 = vmatprep.subr.mxu0 0.0
    %284 = vmatpush2.msra.mxu0 0.0
    %285 = vmatprep.subr.mxu0 0.0
    %286 = vmatpush2.msra.mxu0 0.0
    %287 = vmatprep.subr.mxu0 0.0
    %288 = vmatpush2.msra.mxu0 0.0
    %289 = vmatprep.mubr.f32.mxu0 0.0
    %290 = vmatmul.mubr.f32.gmra.mxu0 %v70
    %v291 = vpop.f32.mrf.mxu0
    %v292 = vadd.f32 0.0, %v291
    %v293 = vpop.f32.mrf.mxu0
    %v294 = vadd.f32 0.0, %v293
    %295 = vdwg.mxu0
    %296 = vmatprep.subr.mxu0 %v224
    %297 = vmatpush1.msra.mxu0 %v223
    %298 = vmatprep.subr.mxu0 %v220
    %299 = vmatpush1.msra.mxu0 %v219
    %300 = vmatprep.subr.mxu0 %v216
    %301 = vmatpush1.msra.mxu0 %v215
    %302 = vmatprep.subr.mxu0 %v212
    %303 = vmatpush1.msra.mxu0 %v211
    %304 = vmatprep.subr.mxu0 %v208
    %305 = vmatpush1.msra.mxu0 %v207
    %306 = vmatprep.subr.mxu0 %v204
    %307 = vmatpush1.msra.mxu0 %v203
    %308 = vmatprep.subr.mxu0 %v200
    %309 = vmatpush1.msra.mxu0 %v199
    %310 = vmatprep.subr.mxu0 %v196
    %311 = vmatpush1.msra.mxu0 %v195
    %312 = vmatprep.subr.mxu0 %v192
    %313 = vmatpush1.msra.mxu0 %v191
    %314 = vmatprep.subr.mxu0 %v188
    %315 = vmatpush1.msra.mxu0 %v187
    %316 = vmatprep.subr.mxu0 %v184
    %317 = vmatpush1.msra.mxu0 %v183
    %318 = vmatprep.subr.mxu0 %v180
    %319 = vmatpush1.msra.mxu0 %v179
    %320 = vmatprep.subr.mxu0 %v176
    %321 = vmatpush1.msra.mxu0 %v175
    %322 = vmatprep.subr.mxu0 %v172
    %323 = vmatpush1.msra.mxu0 %v171
    %324 = vmatprep.subr.mxu0 %v168
    %325 = vmatpush1.msra.mxu0 %v167
    %326 = vmatprep.subr.mxu0 %v164
    %327 = vmatpush1.msra.mxu0 %v163
    %328 = vmatprep.subr.mxu0 0.0
    %329 = vmatpush2.msra.mxu0 0.0
    %330 = vmatprep.subr.mxu0 0.0
    %331 = vmatpush2.msra.mxu0 0.0
    %332 = vmatprep.subr.mxu0 0.0
    %333 = vmatpush2.msra.mxu0 0.0
    %334 = vmatprep.subr.mxu0 0.0
    %335 = vmatpush2.msra.mxu0 0.0
    %336 = vmatprep.subr.mxu0 0.0
    %337 = vmatpush2.msra.mxu0 0.0
    %338 = vmatprep.subr.mxu0 0.0
    %339 = vmatpush2.msra.mxu0 0.0
    %340 = vmatprep.subr.mxu0 0.0
    %341 = vmatpush2.msra.mxu0 0.0
    %342 = vmatprep.subr.mxu0 0.0
    %343 = vmatpush2.msra.mxu0 0.0
    %344 = vmatprep.subr.mxu0 0.0
    %345 = vmatpush2.msra.mxu0 0.0
    %346 = vmatprep.subr.mxu0 0.0
    %347 = vmatpush2.msra.mxu0 0.0
    %348 = vmatprep.subr.mxu0 0.0
    %349 = vmatpush2.msra.mxu0 0.0
    %350 = vmatprep.subr.mxu0 0.0
    %351 = vmatpush2.msra.mxu0 0.0
    %352 = vmatprep.subr.mxu0 0.0
    %353 = vmatpush2.msra.mxu0 0.0
    %354 = vmatprep.subr.mxu0 0.0
    %355 = vmatpush2.msra.mxu0 0.0
    %356 = vmatprep.subr.mxu0 0.0
    %357 = vmatpush2.msra.mxu0 0.0
    %358 = vmatprep.subr.mxu0 0.0
    %359 = vmatpush2.msra.mxu0 0.0
    %360 = vmatprep.mubr.f32.mxu0 0.0
    %361 = vmatmul.mubr.f32.gmra.mxu0 %v70
    %v362 = vpop.f32.mrf.mxu0
    %v363 = vadd.f32 0.0, %v362
    %v364 = vpop.f32.mrf.mxu0
    %v365 = vadd.f32 0.0, %v364
    %366 = vdwg.mxu0
    %v367 = vadd.f32 %v157, %v292
    %v368 = vadd.f32 %v158, %v294
    %v369 = vadd.f32 %v159, %v363
    %v370 = vadd.f32 %v160, %v365
    %v371 = vxor.u32 %v367, 2147483648
    %v372 = vxor.u32 %v368, 2147483648
    %v373 = vxor.u32 %v369, 2147483648
    %v374 = vmul.f32 %v371, 1.442695
    %v375 = vpow.pop %v374
    %v376 = vmul.f32 %v372, 1.442695
    %v377 = vpow.pop %v376
    %v378 = vmul.f32 %v373, 1.442695
    %v379 = vpow.pop %v378
    %v380 = vadd.f32 %v375, 1.0
    %v381 = vadd.f32 %v377, 1.0
    %v382 = vadd.f32 %v379, 1.0
    %v383 = vrcp.pop %v380
    %v384 = vmul.f32 1.0, %v383
    %v385 = vrcp.pop %v381
    %v386 = vmul.f32 1.0, %v385
    %v387 = vrcp.pop %v382
    %v388 = vmul.f32 1.0, %v387
    %v389 = vtanh.pop %v370
    %v390 = vmul.f32 %v386, %v71
    %v391 = vmul.f32 %v384, %v389
    %v392 = vadd.f32 %v390, %v391
    %v393 = vtanh.pop %v392
    %v394 = vmul.f32 %v388, %v393
    %v395 = vld [vmem:[%s0 + $0x8] sm:$0xff]
    %397 = vset.pattern.permute.xlu0 0
    %398 = vperm.xlu0 %397, %v395
    %v399 = vpop.permute.xlu0 %398
    %v401 = vmul.f32 %v399, %v82
    %v402 = vmul.f32 %v399, %v86
    %v403 = vmul.f32 %v399, %v90
    %v404 = vmul.f32 %v399, %v94
    %v405 = vadd.f32 %v107, %v401
    %v406 = vadd.f32 %v111, %v402
    %v407 = vadd.f32 %v115, %v403
    %v408 = vadd.f32 %v119, %v404
    %409 = vset.pattern.permute.xlu0 1
    %410 = vperm.xlu0 %409, %v395
    %v411 = vpop.permute.xlu0 %410
    %v413 = vmul.f32 %v411, %v136
    %v414 = vmul.f32 %v411, %v140
    %v415 = vmul.f32 %v411, %v144
    %v416 = vmul.f32 %v411, %v148
    %v417 = vadd.f32 %v405, %v413
    %v418 = vadd.f32 %v406, %v414
    %v419 = vadd.f32 %v407, %v415
    %v420 = vadd.f32 %v408, %v416
    %421 = vmatprep.subr.mxu0 %v222
    %422 = vmatpush1.msra.mxu0 %v221
    %423 = vmatprep.subr.mxu0 %v218
    %424 = vmatpush1.msra.mxu0 %v217
    %425 = vmatprep.subr.mxu0 %v214
    %426 = vmatpush1.msra.mxu0 %v213
    %427 = vmatprep.subr.mxu0 %v210
    %428 = vmatpush1.msra.mxu0 %v209
    %429 = vmatprep.subr.mxu0 %v206
    %430 = vmatpush1.msra.mxu0 %v205
    %431 = vmatprep.subr.mxu0 %v202
    %432 = vmatpush1.msra.mxu0 %v201
    %433 = vmatprep.subr.mxu0 %v198
    %434 = vmatpush1.msra.mxu0 %v197
    %435 = vmatprep.subr.mxu0 %v194
    %436 = vmatpush1.msra.mxu0 %v193
    %437 = vmatprep.subr.mxu0 %v190
    %438 = vmatpush1.msra.mxu0 %v189
    %439 = vmatprep.subr.mxu0 %v186
    %440 = vmatpush1.msra.mxu0 %v185
    %441 = vmatprep.subr.mxu0 %v182
    %442 = vmatpush1.msra.mxu0 %v181
    %443 = vmatprep.subr.mxu0 %v178
    %444 = vmatpush1.msra.mxu0 %v177
    %445 = vmatprep.subr.mxu0 %v174
    %446 = vmatpush1.msra.mxu0 %v173
    %447 = vmatprep.subr.mxu0 %v170
    %448 = vmatpush1.msra.mxu0 %v169
    %449 = vmatprep.subr.mxu0 %v166
    %450 = vmatpush1.msra.mxu0 %v165
    %451 = vmatprep.subr.mxu0 %v162
    %452 = vmatpush1.msra.mxu0 %v161
    %453 = vmatprep.subr.mxu0 0.0
    %454 = vmatpush2.msra.mxu0 0.0
    %455 = vmatprep.subr.mxu0 0.0
    %456 = vmatpush2.msra.mxu0 0.0
    %457 = vmatprep.subr.mxu0 0.0
    %458 = vmatpush2.msra.mxu0 0.0
    %459 = vmatprep.subr.mxu0 0.0
    %460 = vmatpush2.msra.mxu0 0.0
    %461 = vmatprep.subr.mxu0 0.0
    %462 = vmatpush2.msra.mxu0 0.0
    %463 = vmatprep.subr.mxu0 0.0
    %464 = vmatpush2.msra.mxu0 0.0
    %465 = vmatprep.subr.mxu0 0.0
    %466 = vmatpush2.msra.mxu0 0.0
    %467 = vmatprep.subr.mxu0 0.0
    %468 = vmatpush2.msra.mxu0 0.0
    %469 = vmatprep.subr.mxu0 0.0
    %470 = vmatpush2.msra.mxu0 0.0
    %471 = vmatprep.subr.mxu0 0.0
    %472 = vmatpush2.msra.mxu0 0.0
    %473 = vmatprep.subr.mxu0 0.0
    %474 = vmatpush2.msra.mxu0 0.0
    %475 = vmatprep.subr.mxu0 0.0
    %476 = vmatpush2.msra.mxu0 0.0
    %477 = vmatprep.subr.mxu0 0.0
    %478 = vmatpush2.msra.mxu0 0.0
    %479 = vmatprep.subr.mxu0 0.0
    %480 = vmatpush2.msra.mxu0 0.0
    %481 = vmatprep.subr.mxu0 0.0
    %482 = vmatpush2.msra.mxu0 0.0
    %483 = vmatprep.subr.mxu0 0.0
    %484 = vmatpush2.msra.mxu0 0.0
    %485 = vmatprep.mubr.f32.mxu0 0.0
    %486 = vmatmul.mubr.f32.gmra.mxu0 %v394
    %v487 = vpop.f32.mrf.mxu0
    %v488 = vadd.f32 0.0, %v487
    %v489 = vpop.f32.mrf.mxu0
    %v490 = vadd.f32 0.0, %v489
    %491 = vdwg.mxu0
    %492 = vmatprep.subr.mxu0 %v224
    %493 = vmatpush1.msra.mxu0 %v223
    %494 = vmatprep.subr.mxu0 %v220
    %495 = vmatpush1.msra.mxu0 %v219
    %496 = vmatprep.subr.mxu0 %v216
    %497 = vmatpush1.msra.mxu0 %v215
    %498 = vmatprep.subr.mxu0 %v212
    %499 = vmatpush1.msra.mxu0 %v211
    %500 = vmatprep.subr.mxu0 %v208
    %501 = vmatpush1.msra.mxu0 %v207
    %502 = vmatprep.subr.mxu0 %v204
    %503 = vmatpush1.msra.mxu0 %v203
    %504 = vmatprep.subr.mxu0 %v200
    %505 = vmatpush1.msra.mxu0 %v199
    %506 = vmatprep.subr.mxu0 %v196
    %507 = vmatpush1.msra.mxu0 %v195
    %508 = vmatprep.subr.mxu0 %v192
    %509 = vmatpush1.msra.mxu0 %v191
    %510 = vmatprep.subr.mxu0 %v188
    %511 = vmatpush1.msra.mxu0 %v187
    %512 = vmatprep.subr.mxu0 %v184
    %513 = vmatpush1.msra.mxu0 %v183
    %514 = vmatprep.subr.mxu0 %v180
    %515 = vmatpush1.msra.mxu0 %v179
    %516 = vmatprep.subr.mxu0 %v176
    %517 = vmatpush1.msra.mxu0 %v175
    %518 = vmatprep.subr.mxu0 %v172
    %519 = vmatpush1.msra.mxu0 %v171
    %520 = vmatprep.subr.mxu0 %v168
    %521 = vmatpush1.msra.mxu0 %v167
    %522 = vmatprep.subr.mxu0 %v164
    %523 = vmatpush1.msra.mxu0 %v163
    %524 = vmatprep.subr.mxu0 0.0
    %525 = vmatpush2.msra.mxu0 0.0
    %526 = vmatprep.subr.mxu0 0.0
    %527 = vmatpush2.msra.mxu0 0.0
    %528 = vmatprep.subr.mxu0 0.0
    %529 = vmatpush2.msra.mxu0 0.0
    %530 = vmatprep.subr.mxu0 0.0
    %531 = vmatpush2.msra.mxu0 0.0
    %532 = vmatprep.subr.mxu0 0.0
    %533 = vmatpush2.msra.mxu0 0.0
    %534 = vmatprep.subr.mxu0 0.0
    %535 = vmatpush2.msra.mxu0 0.0
    %536 = vmatprep.subr.mxu0 0.0
    %537 = vmatpush2.msra.mxu0 0.0
    %538 = vmatprep.subr.mxu0 0.0
    %539 = vmatpush2.msra.mxu0 0.0
    %540 = vmatprep.subr.mxu0 0.0
    %541 = vmatpush2.msra.mxu0 0.0
    %542 = vmatprep.subr.mxu0 0.0
    %543 = vmatpush2.msra.mxu0 0.0
    %544 = vmatprep.subr.mxu0 0.0
    %545 = vmatpush2.msra.mxu0 0.0
    %546 = vmatprep.subr.mxu0 0.0
    %547 = vmatpush2.msra.mxu0 0.0
    %548 = vmatprep.subr.mxu0 0.0
    %549 = vmatpush2.msra.mxu0 0.0
    %550 = vmatprep.subr.mxu0 0.0
    %551 = vmatpush2.msra.mxu0 0.0
    %552 = vmatprep.subr.mxu0 0.0
    %553 = vmatpush2.msra.mxu0 0.0
    %554 = vmatprep.subr.mxu0 0.0
    %555 = vmatpush2.msra.mxu0 0.0
    %556 = vmatprep.mubr.f32.mxu0 0.0
    %557 = vmatmul.mubr.f32.gmra.mxu0 %v394
    %v558 = vpop.f32.mrf.mxu0
    %v559 = vadd.f32 0.0, %v558
    %v560 = vpop.f32.mrf.mxu0
    %v561 = vadd.f32 0.0, %v560
    %562 = vdwg.mxu0
    %v563 = vadd.f32 %v417, %v488
    %v564 = vadd.f32 %v418, %v490
    %v565 = vadd.f32 %v419, %v559
    %v566 = vadd.f32 %v420, %v561
    %v567 = vxor.u32 %v563, 2147483648
    %v568 = vxor.u32 %v564, 2147483648
    %v569 = vxor.u32 %v565, 2147483648
    %v570 = vmul.f32 %v567, 1.442695
    %v571 = vpow.pop %v570
    %v572 = vmul.f32 %v568, 1.442695
    %v573 = vpow.pop %v572
    %v574 = vmul.f32 %v569, 1.442695
    %v575 = vpow.pop %v574
    %v576 = vadd.f32 %v571, 1.0
    %v577 = vadd.f32 %v573, 1.0
    %v578 = vadd.f32 %v575, 1.0
    %v579 = vrcp.pop %v576
    %v580 = vmul.f32 1.0, %v579
    %v581 = vrcp.pop %v577
    %v582 = vmul.f32 1.0, %v581
    %v583 = vrcp.pop %v578
    %v584 = vmul.f32 1.0, %v583
    %v585 = vtanh.pop %v566
    %v586 = vmul.f32 %v582, %v392
    %v587 = vmul.f32 %v580, %v585
    %v588 = vadd.f32 %v586, %v587
    %v589 = vtanh.pop %v588
    %v590 = vmul.f32 %v584, %v589
    %v591 = vld [vmem:[%s0 + $0x10] sm:$0xff]
    %593 = vset.pattern.permute.xlu0 0
    %594 = vperm.xlu0 %593, %v591
    %v595 = vpop.permute.xlu0 %594
    %v597 = vmul.f32 %v595, %v82
    %v598 = vmul.f32 %v595, %v86
    %v599 = vmul.f32 %v595, %v90
    %v600 = vmul.f32 %v595, %v94
    %v601 = vadd.f32 %v107, %v597
    %v602 = vadd.f32 %v111, %v598
    %v603 = vadd.f32 %v115, %v599
    %v604 = vadd.f32 %v119, %v600
    %605 = vset.pattern.permute.xlu0 1
    %606 = vperm.xlu0 %605, %v591
    %v607 = vpop.permute.xlu0 %606
    %v609 = vmul.f32 %v607, %v136
    %v610 = vmul.f32 %v607, %v140
    %v611 = vmul.f32 %v607, %v144
    %v612 = vmul.f32 %v607, %v148
    %v613 = vadd.f32 %v601, %v609
    %v614 = vadd.f32 %v602, %v610
    %v615 = vadd.f32 %v603, %v611
    %v616 = vadd.f32 %v604, %v612
    %617 = vmatprep.subr.mxu0 %v222
    %618 = vmatpush1.msra.mxu0 %v221
    %619 = vmatprep.subr.mxu0 %v218
    %620 = vmatpush1.msra.mxu0 %v217
    %621 = vmatprep.subr.mxu0 %v214
    %622 = vmatpush1.msra.mxu0 %v213
    %623 = vmatprep.subr.mxu0 %v210
    %624 = vmatpush1.msra.mxu0 %v209
    %625 = vmatprep.subr.mxu0 %v206
    %626 = vmatpush1.msra.mxu0 %v205
    %627 = vmatprep.subr.mxu0 %v202
    %628 = vmatpush1.msra.mxu0 %v201
    %629 = vmatprep.subr.mxu0 %v198
    %630 = vmatpush1.msra.mxu0 %v197
    %631 = vmatprep.subr.mxu0 %v194
    %632 = vmatpush1.msra.mxu0 %v193
    %633 = vmatprep.subr.mxu0 %v190
    %634 = vmatpush1.msra.mxu0 %v189
    %635 = vmatprep.subr.mxu0 %v186
    %636 = vmatpush1.msra.mxu0 %v185
    %637 = vmatprep.subr.mxu0 %v182
    %638 = vmatpush1.msra.mxu0 %v181
    %639 = vmatprep.subr.mxu0 %v178
    %640 = vmatpush1.msra.mxu0 %v177
    %641 = vmatprep.subr.mxu0 %v174
    %642 = vmatpush1.msra.mxu0 %v173
    %643 = vmatprep.subr.mxu0 %v170
    %644 = vmatpush1.msra.mxu0 %v169
    %645 = vmatprep.subr.mxu0 %v166
    %646 = vmatpush1.msra.mxu0 %v165
    %647 = vmatprep.subr.mxu0 %v162
    %648 = vmatpush1.msra.mxu0 %v161
    %649 = vmatprep.subr.mxu0 0.0
    %650 = vmatpush2.msra.mxu0 0.0
    %651 = vmatprep.subr.mxu0 0.0
    %652 = vmatpush2.msra.mxu0 0.0
    %653 = vmatprep.subr.mxu0 0.0
    %654 = vmatpush2.msra.mxu0 0.0
    %655 = vmatprep.subr.mxu0 0.0
    %656 = vmatpush2.msra.mxu0 0.0
    %657 = vmatprep.subr.mxu0 0.0
    %658 = vmatpush2.msra.mxu0 0.0
    %659 = vmatprep.subr.mxu0 0.0
    %660 = vmatpush2.msra.mxu0 0.0
    %661 = vmatprep.subr.mxu0 0.0
    %662 = vmatpush2.msra.mxu0 0.0
    %663 = vmatprep.subr.mxu0 0.0
    %664 = vmatpush2.msra.mxu0 0.0
    %665 = vmatprep.subr.mxu0 0.0
    %666 = vmatpush2.msra.mxu0 0.0
    %667 = vmatprep.subr.mxu0 0.0
    %668 = vmatpush2.msra.mxu0 0.0
    %669 = vmatprep.subr.mxu0 0.0
    %670 = vmatpush2.msra.mxu0 0.0
    %671 = vmatprep.subr.mxu0 0.0
    %672 = vmatpush2.msra.mxu0 0.0
    %673 = vmatprep.subr.mxu0 0.0
    %674 = vmatpush2.msra.mxu0 0.0
    %675 = vmatprep.subr.mxu0 0.0
    %676 = vmatpush2.msra.mxu0 0.0
    %677 = vmatprep.subr.mxu0 0.0
    %678 = vmatpush2.msra.mxu0 0.0
    %679 = vmatprep.subr.mxu0 0.0
    %680 = vmatpush2.msra.mxu0 0.0
    %681 = vmatprep.mubr.f32.mxu0 0.0
    %682 = vmatmul.mubr.f32.gmra.mxu0 %v590
    %v683 = vpop.f32.mrf.mxu0
    %v684 = vadd.f32 0.0, %v683
    %v685 = vpop.f32.mrf.mxu0
    %v686 = vadd.f32 0.0, %v685
    %687 = vdwg.mxu0
    %688 = vmatprep.subr.mxu0 %v224
    %689 = vmatpush1.msra.mxu0 %v223
    %690 = vmatprep.subr.mxu0 %v220
    %691 = vmatpush1.msra.mxu0 %v219
    %692 = vmatprep.subr.mxu0 %v216
    %693 = vmatpush1.msra.mxu0 %v215
    %694 = vmatprep.subr.mxu0 %v212
    %695 = vmatpush1.msra.mxu0 %v211
    %696 = vmatprep.subr.mxu0 %v208
    %697 = vmatpush1.msra.mxu0 %v207
    %698 = vmatprep.subr.mxu0 %v204
    %699 = vmatpush1.msra.mxu0 %v203
    %700 = vmatprep.subr.mxu0 %v200
    %701 = vmatpush1.msra.mxu0 %v199
    %702 = vmatprep.subr.mxu0 %v196
    %703 = vmatpush1.msra.mxu0 %v195
    %704 = vmatprep.subr.mxu0 %v192
    %705 = vmatpush1.msra.mxu0 %v191
    %706 = vmatprep.subr.mxu0 %v188
    %707 = vmatpush1.msra.mxu0 %v187
    %708 = vmatprep.subr.mxu0 %v184
    %709 = vmatpush1.msra.mxu0 %v183
    %710 = vmatprep.subr.mxu0 %v180
    %711 = vmatpush1.msra.mxu0 %v179
    %712 = vmatprep.subr.mxu0 %v176
    %713 = vmatpush1.msra.mxu0 %v175
    %714 = vmatprep.subr.mxu0 %v172
    %715 = vmatpush1.msra.mxu0 %v171
    %716 = vmatprep.subr.mxu0 %v168
    %717 = vmatpush1.msra.mxu0 %v167
    %718 = vmatprep.subr.mxu0 %v164
    %719 = vmatpush1.msra.mxu0 %v163
    %720 = vmatprep.subr.mxu0 0.0
    %721 = vmatpush2.msra.mxu0 0.0
    %722 = vmatprep.subr.mxu0 0.0
    %723 = vmatpush2.msra.mxu0 0.0
    %724 = vmatprep.subr.mxu0 0.0
    %725 = vmatpush2.msra.mxu0 0.0
    %726 = vmatprep.subr.mxu0 0.0
    %727 = vmatpush2.msra.mxu0 0.0
    %728 = vmatprep.subr.mxu0 0.0
    %729 = vmatpush2.msra.mxu0 0.0
    %730 = vmatprep.subr.mxu0 0.0
    %731 = vmatpush2.msra.mxu0 0.0
    %732 = vmatprep.subr.mxu0 0.0
    %733 = vmatpush2.msra.mxu0 0.0
    %734 = vmatprep.subr.mxu0 0.0
    %735 = vmatpush2.msra.mxu0 0.0
    %736 = vmatprep.subr.mxu0 0.0
    %737 = vmatpush2.msra.mxu0 0.0
    %738 = vmatprep.subr.mxu0 0.0
    %739 = vmatpush2.msra.mxu0 0.0
    %740 = vmatprep.subr.mxu0 0.0
    %741 = vmatpush2.msra.mxu0 0.0
    %742 = vmatprep.subr.mxu0 0.0
    %743 = vmatpush2.msra.mxu0 0.0
    %744 = vmatprep.subr.mxu0 0.0
    %745 = vmatpush2.msra.mxu0 0.0
    %746 = vmatprep.subr.mxu0 0.0
    %747 = vmatpush2.msra.mxu0 0.0
    %748 = vmatprep.subr.mxu0 0.0
    %749 = vmatpush2.msra.mxu0 0.0
    %750 = vmatprep.subr.mxu0 0.0
    %751 = vmatpush2.msra.mxu0 0.0
    %752 = vmatprep.mubr.f32.mxu0 0.0
    %753 = vmatmul.mubr.f32.gmra.mxu0 %v590
    %v754 = vpop.f32.mrf.mxu0
    %v755 = vadd.f32 0.0, %v754
    %v756 = vpop.f32.mrf.mxu0
    %v757 = vadd.f32 0.0, %v756
    %758 = vdwg.mxu0
    %v759 = vadd.f32 %v613, %v684
    %v760 = vadd.f32 %v614, %v686
    %v761 = vadd.f32 %v615, %v755
    %v762 = vadd.f32 %v616, %v757
    %v763 = vxor.u32 %v759, 2147483648
    %v764 = vxor.u32 %v760, 2147483648
    %v765 = vxor.u32 %v761, 2147483648
    %v766 = vmul.f32 %v763, 1.442695
    %v767 = vpow.pop %v766
    %v768 = vmul.f32 %v764, 1.442695
    %v769 = vpow.pop %v768
    %v770 = vmul.f32 %v765, 1.442695
    %v771 = vpow.pop %v770
    %v772 = vadd.f32 %v767, 1.0
    %v773 = vadd.f32 %v769, 1.0
    %v774 = vadd.f32 %v771, 1.0
    %v775 = vrcp.pop %v772
    %v776 = vmul.f32 1.0, %v775
    %v777 = vrcp.pop %v773
    %v778 = vmul.f32 1.0, %v777
    %v779 = vrcp.pop %v774
    %v780 = vmul.f32 1.0, %v779
    %v781 = vtanh.pop %v762
    %v782 = vmul.f32 %v778, %v588
    %v783 = vmul.f32 %v776, %v781
    %v784 = vadd.f32 %v782, %v783
    %v785 = vtanh.pop %v784
    %v786 = vmul.f32 %v780, %v785
    %v787 = vld [vmem:[%s0 + $0x18] sm:$0xff]
    %789 = vset.pattern.permute.xlu0 0
    %790 = vperm.xlu0 %789, %v787
    %v791 = vpop.permute.xlu0 %790
    %v793 = vmul.f32 %v791, %v82
    %v794 = vmul.f32 %v791, %v86
    %v795 = vmul.f32 %v791, %v90
    %v796 = vmul.f32 %v791, %v94
    %v797 = vadd.f32 %v107, %v793
    %v798 = vadd.f32 %v111, %v794
    %v799 = vadd.f32 %v115, %v795
    %v800 = vadd.f32 %v119, %v796
    %801 = vset.pattern.permute.xlu0 1
    %802 = vperm.xlu0 %801, %v787
    %v803 = vpop.permute.xlu0 %802
    %v805 = vmul.f32 %v803, %v136
    %v806 = vmul.f32 %v803, %v140
    %v807 = vmul.f32 %v803, %v144
    %v808 = vmul.f32 %v803, %v148
    %v809 = vadd.f32 %v797, %v805
    %v810 = vadd.f32 %v798, %v806
    %v811 = vadd.f32 %v799, %v807
    %v812 = vadd.f32 %v800, %v808
    %813 = vmatprep.subr.mxu0 %v222
    %814 = vmatpush1.msra.mxu0 %v221
    %815 = vmatprep.subr.mxu0 %v218
    %816 = vmatpush1.msra.mxu0 %v217
    %817 = vmatprep.subr.mxu0 %v214
    %818 = vmatpush1.msra.mxu0 %v213
    %819 = vmatprep.subr.mxu0 %v210
    %820 = vmatpush1.msra.mxu0 %v209
    %821 = vmatprep.subr.mxu0 %v206
    %822 = vmatpush1.msra.mxu0 %v205
    %823 = vmatprep.subr.mxu0 %v202
    %824 = vmatpush1.msra.mxu0 %v201
    %825 = vmatprep.subr.mxu0 %v198
    %826 = vmatpush1.msra.mxu0 %v197
    %827 = vmatprep.subr.mxu0 %v194
    %828 = vmatpush1.msra.mxu0 %v193
    %829 = vmatprep.subr.mxu0 %v190
    %830 = vmatpush1.msra.mxu0 %v189
    %831 = vmatprep.subr.mxu0 %v186
    %832 = vmatpush1.msra.mxu0 %v185
    %833 = vmatprep.subr.mxu0 %v182
    %834 = vmatpush1.msra.mxu0 %v181
    %835 = vmatprep.subr.mxu0 %v178
    %836 = vmatpush1.msra.mxu0 %v177
    %837 = vmatprep.subr.mxu0 %v174
    %838 = vmatpush1.msra.mxu0 %v173
    %839 = vmatprep.subr.mxu0 %v170
    %840 = vmatpush1.msra.mxu0 %v169
    %841 = vmatprep.subr.mxu0 %v166
    %842 = vmatpush1.msra.mxu0 %v165
    %843 = vmatprep.subr.mxu0 %v162
    %844 = vmatpush1.msra.mxu0 %v161
    %845 = vmatprep.subr.mxu0 0.0
    %846 = vmatpush2.msra.mxu0 0.0
    %847 = vmatprep.subr.mxu0 0.0
    %848 = vmatpush2.msra.mxu0 0.0
    %849 = vmatprep.subr.mxu0 0.0
    %850 = vmatpush2.msra.mxu0 0.0
    %851 = vmatprep.subr.mxu0 0.0
    %852 = vmatpush2.msra.mxu0 0.0
    %853 = vmatprep.subr.mxu0 0.0
    %854 = vmatpush2.msra.mxu0 0.0
    %855 = vmatprep.subr.mxu0 0.0
    %856 = vmatpush2.msra.mxu0 0.0
    %857 = vmatprep.subr.mxu0 0.0
    %858 = vmatpush2.msra.mxu0 0.0
    %859 = vmatprep.subr.mxu0 0.0
    %860 = vmatpush2.msra.mxu0 0.0
    %861 = vmatprep.subr.mxu0 0.0
    %862 = vmatpush2.msra.mxu0 0.0
    %863 = vmatprep.subr.mxu0 0.0
    %864 = vmatpush2.msra.mxu0 0.0
    %865 = vmatprep.subr.mxu0 0.0
    %866 = vmatpush2.msra.mxu0 0.0
    %867 = vmatprep.subr.mxu0 0.0
    %868 = vmatpush2.msra.mxu0 0.0
    %869 = vmatprep.subr.mxu0 0.0
    %870 = vmatpush2.msra.mxu0 0.0
    %871 = vmatprep.subr.mxu0 0.0
    %872 = vmatpush2.msra.mxu0 0.0
    %873 = vmatprep.subr.mxu0 0.0
    %874 = vmatpush2.msra.mxu0 0.0
    %875 = vmatprep.subr.mxu0 0.0
    %876 = vmatpush2.msra.mxu0 0.0
    %877 = vmatprep.mubr.f32.mxu0 0.0
    %878 = vmatmul.mubr.f32.gmra.mxu0 %v786
    %v879 = vpop.f32.mrf.mxu0
    %v880 = vadd.f32 0.0, %v879
    %v881 = vpop.f32.mrf.mxu0
    %v882 = vadd.f32 0.0, %v881
    %883 = vdwg.mxu0
    %884 = vmatprep.subr.mxu0 %v224
    %885 = vmatpush1.msra.mxu0 %v223
    %886 = vmatprep.subr.mxu0 %v220
    %887 = vmatpush1.msra.mxu0 %v219
    %888 = vmatprep.subr.mxu0 %v216
    %889 = vmatpush1.msra.mxu0 %v215
    %890 = vmatprep.subr.mxu0 %v212
    %891 = vmatpush1.msra.mxu0 %v211
    %892 = vmatprep.subr.mxu0 %v208
    %893 = vmatpush1.msra.mxu0 %v207
    %894 = vmatprep.subr.mxu0 %v204
    %895 = vmatpush1.msra.mxu0 %v203
    %896 = vmatprep.subr.mxu0 %v200
    %897 = vmatpush1.msra.mxu0 %v199
    %898 = vmatprep.subr.mxu0 %v196
    %899 = vmatpush1.msra.mxu0 %v195
    %900 = vmatprep.subr.mxu0 %v192
    %901 = vmatpush1.msra.mxu0 %v191
    %902 = vmatprep.subr.mxu0 %v188
    %903 = vmatpush1.msra.mxu0 %v187
    %904 = vmatprep.subr.mxu0 %v184
    %905 = vmatpush1.msra.mxu0 %v183
    %906 = vmatprep.subr.mxu0 %v180
    %907 = vmatpush1.msra.mxu0 %v179
    %908 = vmatprep.subr.mxu0 %v176
    %909 = vmatpush1.msra.mxu0 %v175
    %910 = vmatprep.subr.mxu0 %v172
    %911 = vmatpush1.msra.mxu0 %v171
    %912 = vmatprep.subr.mxu0 %v168
    %913 = vmatpush1.msra.mxu0 %v167
    %914 = vmatprep.subr.mxu0 %v164
    %915 = vmatpush1.msra.mxu0 %v163
    %916 = vmatprep.subr.mxu0 0.0
    %917 = vmatpush2.msra.mxu0 0.0
    %918 = vmatprep.subr.mxu0 0.0
    %919 = vmatpush2.msra.mxu0 0.0
    %920 = vmatprep.subr.mxu0 0.0
    %921 = vmatpush2.msra.mxu0 0.0
    %922 = vmatprep.subr.mxu0 0.0
    %923 = vmatpush2.msra.mxu0 0.0
    %924 = vmatprep.subr.mxu0 0.0
    %925 = vmatpush2.msra.mxu0 0.0
    %926 = vmatprep.subr.mxu0 0.0
    %927 = vmatpush2.msra.mxu0 0.0
    %928 = vmatprep.subr.mxu0 0.0
    %929 = vmatpush2.msra.mxu0 0.0
    %930 = vmatprep.subr.mxu0 0.0
    %931 = vmatpush2.msra.mxu0 0.0
    %932 = vmatprep.subr.mxu0 0.0
    %933 = vmatpush2.msra.mxu0 0.0
    %934 = vmatprep.subr.mxu0 0.0
    %935 = vmatpush2.msra.mxu0 0.0
    %936 = vmatprep.subr.mxu0 0.0
    %937 = vmatpush2.msra.mxu0 0.0
    %938 = vmatprep.subr.mxu0 0.0
    %939 = vmatpush2.msra.mxu0 0.0
    %940 = vmatprep.subr.mxu0 0.0
    %941 = vmatpush2.msra.mxu0 0.0
    %942 = vmatprep.subr.mxu0 0.0
    %943 = vmatpush2.msra.mxu0 0.0
    %944 = vmatprep.subr.mxu0 0.0
    %945 = vmatpush2.msra.mxu0 0.0
    %946 = vmatprep.subr.mxu0 0.0
    %947 = vmatpush2.msra.mxu0 0.0
    %948 = vmatprep.mubr.f32.mxu0 0.0
    %949 = vmatmul.mubr.f32.gmra.mxu0 %v786
    %v950 = vpop.f32.mrf.mxu0
    %v951 = vadd.f32 0.0, %v950
    %v952 = vpop.f32.mrf.mxu0
    %v953 = vadd.f32 0.0, %v952
    %954 = vdwg.mxu0
    %v955 = vadd.f32 %v809, %v880
    %v956 = vadd.f32 %v810, %v882
    %v957 = vadd.f32 %v811, %v951
    %v958 = vadd.f32 %v812, %v953
    %v959 = vxor.u32 %v955, 2147483648
    %v960 = vxor.u32 %v956, 2147483648
    %v961 = vxor.u32 %v957, 2147483648
    %v962 = vmul.f32 %v959, 1.442695
    %v963 = vpow.pop %v962
    %v964 = vmul.f32 %v960, 1.442695
    %v965 = vpow.pop %v964
    %v966 = vmul.f32 %v961, 1.442695
    %v967 = vpow.pop %v966
    %v968 = vadd.f32 %v963, 1.0
    %v969 = vadd.f32 %v965, 1.0
    %v970 = vadd.f32 %v967, 1.0
    %v971 = vrcp.pop %v968
    %v972 = vmul.f32 1.0, %v971
    %v973 = vrcp.pop %v969
    %v974 = vmul.f32 1.0, %v973
    %v975 = vrcp.pop %v970
    %v976 = vmul.f32 1.0, %v975
    %v977 = vtanh.pop %v958
    %v978 = vmul.f32 %v974, %v784
    %v979 = vmul.f32 %v972, %v977
    %v980 = vadd.f32 %v978, %v979
    %v981 = vtanh.pop %v980
    %v982 = vmul.f32 %v976, %v981
    %v983 = vld [vmem:[%s0 + $0x20] sm:$0xff]
    %985 = vset.pattern.permute.xlu0 0
    %986 = vperm.xlu0 %985, %v983
    %v987 = vpop.permute.xlu0 %986
    %v989 = vmul.f32 %v987, %v82
    %v990 = vmul.f32 %v987, %v86
    %v991 = vmul.f32 %v987, %v90
    %v992 = vmul.f32 %v987, %v94
    %v993 = vadd.f32 %v107, %v989
    %v994 = vadd.f32 %v111, %v990
    %v995 = vadd.f32 %v115, %v991
    %v996 = vadd.f32 %v119, %v992
    %997 = vset.pattern.permute.xlu0 1
    %998 = vperm.xlu0 %997, %v983
    %v999 = vpop.permute.xlu0 %998
    %v1001 = vmul.f32 %v999, %v136
    %v1002 = vmul.f32 %v999, %v140
    %v1003 = vmul.f32 %v999, %v144
    %v1004 = vmul.f32 %v999, %v148
    %v1005 = vadd.f32 %v993, %v1001
    %v1006 = vadd.f32 %v994, %v1002
    %v1007 = vadd.f32 %v995, %v1003
    %v1008 = vadd.f32 %v996, %v1004
    %1009 = vmatprep.subr.mxu0 %v222
    %1010 = vmatpush1.msra.mxu0 %v221
    %1011 = vmatprep.subr.mxu0 %v218
    %1012 = vmatpush1.msra.mxu0 %v217
    %1013 = vmatprep.subr.mxu0 %v214
    %1014 = vmatpush1.msra.mxu0 %v213
    %1015 = vmatprep.subr.mxu0 %v210
    %1016 = vmatpush1.msra.mxu0 %v209
    %1017 = vmatprep.subr.mxu0 %v206
    %1018 = vmatpush1.msra.mxu0 %v205
    %1019 = vmatprep.subr.mxu0 %v202
    %1020 = vmatpush1.msra.mxu0 %v201
    %1021 = vmatprep.subr.mxu0 %v198
    %1022 = vmatpush1.msra.mxu0 %v197
    %1023 = vmatprep.subr.mxu0 %v194
    %1024 = vmatpush1.msra.mxu0 %v193
    %1025 = vmatprep.subr.mxu0 %v190
    %1026 = vmatpush1.msra.mxu0 %v189
    %1027 = vmatprep.subr.mxu0 %v186
    %1028 = vmatpush1.msra.mxu0 %v185
    %1029 = vmatprep.subr.mxu0 %v182
    %1030 = vmatpush1.msra.mxu0 %v181
    %1031 = vmatprep.subr.mxu0 %v178
    %1032 = vmatpush1.msra.mxu0 %v177
    %1033 = vmatprep.subr.mxu0 %v174
    %1034 = vmatpush1.msra.mxu0 %v173
    %1035 = vmatprep.subr.mxu0 %v170
    %1036 = vmatpush1.msra.mxu0 %v169
    %1037 = vmatprep.subr.mxu0 %v166
    %1038 = vmatpush1.msra.mxu0 %v165
    %1039 = vmatprep.subr.mxu0 %v162
    %1040 = vmatpush1.msra.mxu0 %v161
    %1041 = vmatprep.subr.mxu0 0.0
    %1042 = vmatpush2.msra.mxu0 0.0
    %1043 = vmatprep.subr.mxu0 0.0
    %1044 = vmatpush2.msra.mxu0 0.0
    %1045 = vmatprep.subr.mxu0 0.0
    %1046 = vmatpush2.msra.mxu0 0.0
    %1047 = vmatprep.subr.mxu0 0.0
    %1048 = vmatpush2.msra.mxu0 0.0
    %1049 = vmatprep.subr.mxu0 0.0
    %1050 = vmatpush2.msra.mxu0 0.0
    %1051 = vmatprep.subr.mxu0 0.0
    %1052 = vmatpush2.msra.mxu0 0.0
    %1053 = vmatprep.subr.mxu0 0.0
    %1054 = vmatpush2.msra.mxu0 0.0
    %1055 = vmatprep.subr.mxu0 0.0
    %1056 = vmatpush2.msra.mxu0 0.0
    %1057 = vmatprep.subr.mxu0 0.0
    %1058 = vmatpush2.msra.mxu0 0.0
    %1059 = vmatprep.subr.mxu0 0.0
    %1060 = vmatpush2.msra.mxu0 0.0
    %1061 = vmatprep.subr.mxu0 0.0
    %1062 = vmatpush2.msra.mxu0 0.0
    %1063 = vmatprep.subr.mxu0 0.0
    %1064 = vmatpush2.msra.mxu0 0.0
    %1065 = vmatprep.subr.mxu0 0.0
    %1066 = vmatpush2.msra.mxu0 0.0
    %1067 = vmatprep.subr.mxu0 0.0
    %1068 = vmatpush2.msra.mxu0 0.0
    %1069 = vmatprep.subr.mxu0 0.0
    %1070 = vmatpush2.msra.mxu0 0.0
    %1071 = vmatprep.subr.mxu0 0.0
    %1072 = vmatpush2.msra.mxu0 0.0
    %1073 = vmatprep.mubr.f32.mxu0 0.0
    %1074 = vmatmul.mubr.f32.gmra.mxu0 %v982
    %v1075 = vpop.f32.mrf.mxu0
    %v1076 = vadd.f32 0.0, %v1075
    %v1077 = vpop.f32.mrf.mxu0
    %v1078 = vadd.f32 0.0, %v1077
    %1079 = vdwg.mxu0
    %1080 = vmatprep.subr.mxu0 %v224
    %1081 = vmatpush1.msra.mxu0 %v223
    %1082 = vmatprep.subr.mxu0 %v220
    %1083 = vmatpush1.msra.mxu0 %v219
    %1084 = vmatprep.subr.mxu0 %v216
    %1085 = vmatpush1.msra.mxu0 %v215
    %1086 = vmatprep.subr.mxu0 %v212
    %1087 = vmatpush1.msra.mxu0 %v211
    %1088 = vmatprep.subr.mxu0 %v208
    %1089 = vmatpush1.msra.mxu0 %v207
    %1090 = vmatprep.subr.mxu0 %v204
    %1091 = vmatpush1.msra.mxu0 %v203
    %1092 = vmatprep.subr.mxu0 %v200
    %1093 = vmatpush1.msra.mxu0 %v199
    %1094 = vmatprep.subr.mxu0 %v196
    %1095 = vmatpush1.msra.mxu0 %v195
    %1096 = vmatprep.subr.mxu0 %v192
    %1097 = vmatpush1.msra.mxu0 %v191
    %1098 = vmatprep.subr.mxu0 %v188
    %1099 = vmatpush1.msra.mxu0 %v187
    %1100 = vmatprep.subr.mxu0 %v184
    %1101 = vmatpush1.msra.mxu0 %v183
    %1102 = vmatprep.subr.mxu0 %v180
    %1103 = vmatpush1.msra.mxu0 %v179
    %1104 = vmatprep.subr.mxu0 %v176
    %1105 = vmatpush1.msra.mxu0 %v175
    %1106 = vmatprep.subr.mxu0 %v172
    %1107 = vmatpush1.msra.mxu0 %v171
    %1108 = vmatprep.subr.mxu0 %v168
    %1109 = vmatpush1.msra.mxu0 %v167
    %1110 = vmatprep.subr.mxu0 %v164
    %1111 = vmatpush1.msra.mxu0 %v163
    %1112 = vmatprep.subr.mxu0 0.0
    %1113 = vmatpush2.msra.mxu0 0.0
    %1114 = vmatprep.subr.mxu0 0.0
    %1115 = vmatpush2.msra.mxu0 0.0
    %1116 = vmatprep.subr.mxu0 0.0
    %1117 = vmatpush2.msra.mxu0 0.0
    %1118 = vmatprep.subr.mxu0 0.0
    %1119 = vmatpush2.msra.mxu0 0.0
    %1120 = vmatprep.subr.mxu0 0.0
    %1121 = vmatpush2.msra.mxu0 0.0
    %1122 = vmatprep.subr.mxu0 0.0
    %1123 = vmatpush2.msra.mxu0 0.0
    %1124 = vmatprep.subr.mxu0 0.0
    %1125 = vmatpush2.msra.mxu0 0.0
    %1126 = vmatprep.subr.mxu0 0.0
    %1127 = vmatpush2.msra.mxu0 0.0
    %1128 = vmatprep.subr.mxu0 0.0
    %1129 = vmatpush2.msra.mxu0 0.0
    %1130 = vmatprep.subr.mxu0 0.0
    %1131 = vmatpush2.msra.mxu0 0.0
    %1132 = vmatprep.subr.mxu0 0.0
    %1133 = vmatpush2.msra.mxu0 0.0
    %1134 = vmatprep.subr.mxu0 0.0
    %1135 = vmatpush2.msra.mxu0 0.0
    %1136 = vmatprep.subr.mxu0 0.0
    %1137 = vmatpush2.msra.mxu0 0.0
    %1138 = vmatprep.subr.mxu0 0.0
    %1139 = vmatpush2.msra.mxu0 0.0
    %1140 = vmatprep.subr.mxu0 0.0
    %1141 = vmatpush2.msra.mxu0 0.0
    %1142 = vmatprep.subr.mxu0 0.0
    %1143 = vmatpush2.msra.mxu0 0.0
    %1144 = vmatprep.mubr.f32.mxu0 0.0
    %1145 = vmatmul.mubr.f32.gmra.mxu0 %v982
    %v1146 = vpop.f32.mrf.mxu0
    %v1147 = vadd.f32 0.0, %v1146
    %v1148 = vpop.f32.mrf.mxu0
    %v1149 = vadd.f32 0.0, %v1148
    %1150 = vdwg.mxu0
    %v1151 = vadd.f32 %v1005, %v1076
    %v1152 = vadd.f32 %v1006, %v1078
    %v1153 = vadd.f32 %v1007, %v1147
    %v1154 = vadd.f32 %v1008, %v1149
    %v1155 = vxor.u32 %v1151, 2147483648
    %v1156 = vxor.u32 %v1152, 2147483648
    %v1157 = vxor.u32 %v1153, 2147483648
    %v1158 = vmul.f32 %v1155, 1.442695
    %v1159 = vpow.pop %v1158
    %v1160 = vmul.f32 %v1156, 1.442695
    %v1161 = vpow.pop %v1160
    %v1162 = vmul.f32 %v1157, 1.442695
    %v1163 = vpow.pop %v1162
    %v1164 = vadd.f32 %v1159, 1.0
    %v1165 = vadd.f32 %v1161, 1.0
    %v1166 = vadd.f32 %v1163, 1.0
    %v1167 = vrcp.pop %v1164
    %v1168 = vmul.f32 1.0, %v1167
    %v1169 = vrcp.pop %v1165
    %v1170 = vmul.f32 1.0, %v1169
    %v1171 = vrcp.pop %v1166
    %v1172 = vmul.f32 1.0, %v1171
    %v1173 = vtanh.pop %v1154
    %v1174 = vmul.f32 %v1170, %v980
    %v1175 = vmul.f32 %v1168, %v1173
    %v1176 = vadd.f32 %v1174, %v1175
    %v1177 = vtanh.pop %v1176
    %v1178 = vmul.f32 %v1172, %v1177
    %v1179 = vld [vmem:[%s0 + $0x28] sm:$0xff]
    %1181 = vset.pattern.permute.xlu0 0
    %1182 = vperm.xlu0 %1181, %v1179
    %v1183 = vpop.permute.xlu0 %1182
    %v1185 = vmul.f32 %v1183, %v82
    %v1186 = vmul.f32 %v1183, %v86
    %v1187 = vmul.f32 %v1183, %v90
    %v1188 = vmul.f32 %v1183, %v94
    %v1189 = vadd.f32 %v107, %v1185
    %v1190 = vadd.f32 %v111, %v1186
    %v1191 = vadd.f32 %v115, %v1187
    %v1192 = vadd.f32 %v119, %v1188
    %1193 = vset.pattern.permute.xlu0 1
    %1194 = vperm.xlu0 %1193, %v1179
    %v1195 = vpop.permute.xlu0 %1194
    %v1197 = vmul.f32 %v1195, %v136
    %v1198 = vmul.f32 %v1195, %v140
    %v1199 = vmul.f32 %v1195, %v144
    %v1200 = vmul.f32 %v1195, %v148
    %v1201 = vadd.f32 %v1189, %v1197
    %v1202 = vadd.f32 %v1190, %v1198
    %v1203 = vadd.f32 %v1191, %v1199
    %v1204 = vadd.f32 %v1192, %v1200
    %1205 = vmatprep.subr.mxu0 %v222
    %1206 = vmatpush1.msra.mxu0 %v221
    %1207 = vmatprep.subr.mxu0 %v218
    %1208 = vmatpush1.msra.mxu0 %v217
    %1209 = vmatprep.subr.mxu0 %v214
    %1210 = vmatpush1.msra.mxu0 %v213
    %1211 = vmatprep.subr.mxu0 %v210
    %1212 = vmatpush1.msra.mxu0 %v209
    %1213 = vmatprep.subr.mxu0 %v206
    %1214 = vmatpush1.msra.mxu0 %v205
    %1215 = vmatprep.subr.mxu0 %v202
    %1216 = vmatpush1.msra.mxu0 %v201
    %1217 = vmatprep.subr.mxu0 %v198
    %1218 = vmatpush1.msra.mxu0 %v197
    %1219 = vmatprep.subr.mxu0 %v194
    %1220 = vmatpush1.msra.mxu0 %v193
    %1221 = vmatprep.subr.mxu0 %v190
    %1222 = vmatpush1.msra.mxu0 %v189
    %1223 = vmatprep.subr.mxu0 %v186
    %1224 = vmatpush1.msra.mxu0 %v185
    %1225 = vmatprep.subr.mxu0 %v182
    %1226 = vmatpush1.msra.mxu0 %v181
    %1227 = vmatprep.subr.mxu0 %v178
    %1228 = vmatpush1.msra.mxu0 %v177
    %1229 = vmatprep.subr.mxu0 %v174
    %1230 = vmatpush1.msra.mxu0 %v173
    %1231 = vmatprep.subr.mxu0 %v170
    %1232 = vmatpush1.msra.mxu0 %v169
    %1233 = vmatprep.subr.mxu0 %v166
    %1234 = vmatpush1.msra.mxu0 %v165
    %1235 = vmatprep.subr.mxu0 %v162
    %1236 = vmatpush1.msra.mxu0 %v161
    %1237 = vmatprep.subr.mxu0 0.0
    %1238 = vmatpush2.msra.mxu0 0.0
    %1239 = vmatprep.subr.mxu0 0.0
    %1240 = vmatpush2.msra.mxu0 0.0
    %1241 = vmatprep.subr.mxu0 0.0
    %1242 = vmatpush2.msra.mxu0 0.0
    %1243 = vmatprep.subr.mxu0 0.0
    %1244 = vmatpush2.msra.mxu0 0.0
    %1245 = vmatprep.subr.mxu0 0.0
    %1246 = vmatpush2.msra.mxu0 0.0
    %1247 = vmatprep.subr.mxu0 0.0
    %1248 = vmatpush2.msra.mxu0 0.0
    %1249 = vmatprep.subr.mxu0 0.0
    %1250 = vmatpush2.msra.mxu0 0.0
    %1251 = vmatprep.subr.mxu0 0.0
    %1252 = vmatpush2.msra.mxu0 0.0
    %1253 = vmatprep.subr.mxu0 0.0
    %1254 = vmatpush2.msra.mxu0 0.0
    %1255 = vmatprep.subr.mxu0 0.0
    %1256 = vmatpush2.msra.mxu0 0.0
    %1257 = vmatprep.subr.mxu0 0.0
    %1258 = vmatpush2.msra.mxu0 0.0
    %1259 = vmatprep.subr.mxu0 0.0
    %1260 = vmatpush2.msra.mxu0 0.0
    %1261 = vmatprep.subr.mxu0 0.0
    %1262 = vmatpush2.msra.mxu0 0.0
    %1263 = vmatprep.subr.mxu0 0.0
    %1264 = vmatpush2.msra.mxu0 0.0
    %1265 = vmatprep.subr.mxu0 0.0
    %1266 = vmatpush2.msra.mxu0 0.0
    %1267 = vmatprep.subr.mxu0 0.0
    %1268 = vmatpush2.msra.mxu0 0.0
    %1269 = vmatprep.mubr.f32.mxu0 0.0
    %1270 = vmatmul.mubr.f32.gmra.mxu0 %v1178
    %v1271 = vpop.f32.mrf.mxu0
    %v1272 = vadd.f32 0.0, %v1271
    %v1273 = vpop.f32.mrf.mxu0
    %v1274 = vadd.f32 0.0, %v1273
    %1275 = vdwg.mxu0
    %1276 = vmatprep.subr.mxu0 %v224
    %1277 = vmatpush1.msra.mxu0 %v223
    %1278 = vmatprep.subr.mxu0 %v220
    %1279 = vmatpush1.msra.mxu0 %v219
    %1280 = vmatprep.subr.mxu0 %v216
    %1281 = vmatpush1.msra.mxu0 %v215
    %1282 = vmatprep.subr.mxu0 %v212
    %1283 = vmatpush1.msra.mxu0 %v211
    %1284 = vmatprep.subr.mxu0 %v208
    %1285 = vmatpush1.msra.mxu0 %v207
    %1286 = vmatprep.subr.mxu0 %v204
    %1287 = vmatpush1.msra.mxu0 %v203
    %1288 = vmatprep.subr.mxu0 %v200
    %1289 = vmatpush1.msra.mxu0 %v199
    %1290 = vmatprep.subr.mxu0 %v196
    %1291 = vmatpush1.msra.mxu0 %v195
    %1292 = vmatprep.subr.mxu0 %v192
    %1293 = vmatpush1.msra.mxu0 %v191
    %1294 = vmatprep.subr.mxu0 %v188
    %1295 = vmatpush1.msra.mxu0 %v187
    %1296 = vmatprep.subr.mxu0 %v184
    %1297 = vmatpush1.msra.mxu0 %v183
    %1298 = vmatprep.subr.mxu0 %v180
    %1299 = vmatpush1.msra.mxu0 %v179
    %1300 = vmatprep.subr.mxu0 %v176
    %1301 = vmatpush1.msra.mxu0 %v175
    %1302 = vmatprep.subr.mxu0 %v172
    %1303 = vmatpush1.msra.mxu0 %v171
    %1304 = vmatprep.subr.mxu0 %v168
    %1305 = vmatpush1.msra.mxu0 %v167
    %1306 = vmatprep.subr.mxu0 %v164
    %1307 = vmatpush1.msra.mxu0 %v163
    %1308 = vmatprep.subr.mxu0 0.0
    %1309 = vmatpush2.msra.mxu0 0.0
    %1310 = vmatprep.subr.mxu0 0.0
    %1311 = vmatpush2.msra.mxu0 0.0
    %1312 = vmatprep.subr.mxu0 0.0
    %1313 = vmatpush2.msra.mxu0 0.0
    %1314 = vmatprep.subr.mxu0 0.0
    %1315 = vmatpush2.msra.mxu0 0.0
    %1316 = vmatprep.subr.mxu0 0.0
    %1317 = vmatpush2.msra.mxu0 0.0
    %1318 = vmatprep.subr.mxu0 0.0
    %1319 = vmatpush2.msra.mxu0 0.0
    %1320 = vmatprep.subr.mxu0 0.0
    %1321 = vmatpush2.msra.mxu0 0.0
    %1322 = vmatprep.subr.mxu0 0.0
    %1323 = vmatpush2.msra.mxu0 0.0
    %1324 = vmatprep.subr.mxu0 0.0
    %1325 = vmatpush2.msra.mxu0 0.0
    %1326 = vmatprep.subr.mxu0 0.0
    %1327 = vmatpush2.msra.mxu0 0.0
    %1328 = vmatprep.subr.mxu0 0.0
    %1329 = vmatpush2.msra.mxu0 0.0
    %1330 = vmatprep.subr.mxu0 0.0
    %1331 = vmatpush2.msra.mxu0 0.0
    %1332 = vmatprep.subr.mxu0 0.0
    %1333 = vmatpush2.msra.mxu0 0.0
    %1334 = vmatprep.subr.mxu0 0.0
    %1335 = vmatpush2.msra.mxu0 0.0
    %1336 = vmatprep.subr.mxu0 0.0
    %1337 = vmatpush2.msra.mxu0 0.0
    %1338 = vmatprep.subr.mxu0 0.0
    %1339 = vmatpush2.msra.mxu0 0.0
    %1340 = vmatprep.mubr.f32.mxu0 0.0
    %1341 = vmatmul.mubr.f32.gmra.mxu0 %v1178
    %v1342 = vpop.f32.mrf.mxu0
    %v1343 = vadd.f32 0.0, %v1342
    %v1344 = vpop.f32.mrf.mxu0
    %v1345 = vadd.f32 0.0, %v1344
    %1346 = vdwg.mxu0
    %v1347 = vadd.f32 %v1201, %v1272
    %v1348 = vadd.f32 %v1202, %v1274
    %v1349 = vadd.f32 %v1203, %v1343
    %v1350 = vadd.f32 %v1204, %v1345
    %v1351 = vxor.u32 %v1347, 2147483648
    %v1352 = vxor.u32 %v1348, 2147483648
    %v1353 = vxor.u32 %v1349, 2147483648
    %v1354 = vmul.f32 %v1351, 1.442695
    %v1355 = vpow.pop %v1354
    %v1356 = vmul.f32 %v1352, 1.442695
    %v1357 = vpow.pop %v1356
    %v1358 = vmul.f32 %v1353, 1.442695
    %v1359 = vpow.pop %v1358
    %v1360 = vadd.f32 %v1355, 1.0
    %v1361 = vadd.f32 %v1357, 1.0
    %v1362 = vadd.f32 %v1359, 1.0
    %v1363 = vrcp.pop %v1360
    %v1364 = vmul.f32 1.0, %v1363
    %v1365 = vrcp.pop %v1361
    %v1366 = vmul.f32 1.0, %v1365
    %v1367 = vrcp.pop %v1362
    %v1368 = vmul.f32 1.0, %v1367
    %v1369 = vtanh.pop %v1350
    %v1370 = vmul.f32 %v1366, %v1176
    %v1371 = vmul.f32 %v1364, %v1369
    %v1372 = vadd.f32 %v1370, %v1371
    %v1373 = vtanh.pop %v1372
    %v1374 = vmul.f32 %v1368, %v1373
    %v1375 = vld [vmem:[%s0 + $0x30] sm:$0xff]
    %1377 = vset.pattern.permute.xlu0 0
    %1378 = vperm.xlu0 %1377, %v1375
    %v1379 = vpop.permute.xlu0 %1378
    %v1381 = vmul.f32 %v1379, %v82
    %v1382 = vmul.f32 %v1379, %v86
    %v1383 = vmul.f32 %v1379, %v90
    %v1384 = vmul.f32 %v1379, %v94
    %v1385 = vadd.f32 %v107, %v1381
    %v1386 = vadd.f32 %v111, %v1382
    %v1387 = vadd.f32 %v115, %v1383
    %v1388 = vadd.f32 %v119, %v1384
    %1389 = vset.pattern.permute.xlu0 1
    %1390 = vperm.xlu0 %1389, %v1375
    %v1391 = vpop.permute.xlu0 %1390
    %v1393 = vmul.f32 %v1391, %v136
    %v1394 = vmul.f32 %v1391, %v140
    %v1395 = vmul.f32 %v1391, %v144
    %v1396 = vmul.f32 %v1391, %v148
    %v1397 = vadd.f32 %v1385, %v1393
    %v1398 = vadd.f32 %v1386, %v1394
    %v1399 = vadd.f32 %v1387, %v1395
    %v1400 = vadd.f32 %v1388, %v1396
    %1401 = vmatprep.subr.mxu0 %v222
    %1402 = vmatpush1.msra.mxu0 %v221
    %1403 = vmatprep.subr.mxu0 %v218
    %1404 = vmatpush1.msra.mxu0 %v217
    %1405 = vmatprep.subr.mxu0 %v214
    %1406 = vmatpush1.msra.mxu0 %v213
    %1407 = vmatprep.subr.mxu0 %v210
    %1408 = vmatpush1.msra.mxu0 %v209
    %1409 = vmatprep.subr.mxu0 %v206
    %1410 = vmatpush1.msra.mxu0 %v205
    %1411 = vmatprep.subr.mxu0 %v202
    %1412 = vmatpush1.msra.mxu0 %v201
    %1413 = vmatprep.subr.mxu0 %v198
    %1414 = vmatpush1.msra.mxu0 %v197
    %1415 = vmatprep.subr.mxu0 %v194
    %1416 = vmatpush1.msra.mxu0 %v193
    %1417 = vmatprep.subr.mxu0 %v190
    %1418 = vmatpush1.msra.mxu0 %v189
    %1419 = vmatprep.subr.mxu0 %v186
    %1420 = vmatpush1.msra.mxu0 %v185
    %1421 = vmatprep.subr.mxu0 %v182
    %1422 = vmatpush1.msra.mxu0 %v181
    %1423 = vmatprep.subr.mxu0 %v178
    %1424 = vmatpush1.msra.mxu0 %v177
    %1425 = vmatprep.subr.mxu0 %v174
    %1426 = vmatpush1.msra.mxu0 %v173
    %1427 = vmatprep.subr.mxu0 %v170
    %1428 = vmatpush1.msra.mxu0 %v169
    %1429 = vmatprep.subr.mxu0 %v166
    %1430 = vmatpush1.msra.mxu0 %v165
    %1431 = vmatprep.subr.mxu0 %v162
    %1432 = vmatpush1.msra.mxu0 %v161
    %1433 = vmatprep.subr.mxu0 0.0
    %1434 = vmatpush2.msra.mxu0 0.0
    %1435 = vmatprep.subr.mxu0 0.0
    %1436 = vmatpush2.msra.mxu0 0.0
    %1437 = vmatprep.subr.mxu0 0.0
    %1438 = vmatpush2.msra.mxu0 0.0
    %1439 = vmatprep.subr.mxu0 0.0
    %1440 = vmatpush2.msra.mxu0 0.0
    %1441 = vmatprep.subr.mxu0 0.0
    %1442 = vmatpush2.msra.mxu0 0.0
    %1443 = vmatprep.subr.mxu0 0.0
    %1444 = vmatpush2.msra.mxu0 0.0
    %1445 = vmatprep.subr.mxu0 0.0
    %1446 = vmatpush2.msra.mxu0 0.0
    %1447 = vmatprep.subr.mxu0 0.0
    %1448 = vmatpush2.msra.mxu0 0.0
    %1449 = vmatprep.subr.mxu0 0.0
    %1450 = vmatpush2.msra.mxu0 0.0
    %1451 = vmatprep.subr.mxu0 0.0
    %1452 = vmatpush2.msra.mxu0 0.0
    %1453 = vmatprep.subr.mxu0 0.0
    %1454 = vmatpush2.msra.mxu0 0.0
    %1455 = vmatprep.subr.mxu0 0.0
    %1456 = vmatpush2.msra.mxu0 0.0
    %1457 = vmatprep.subr.mxu0 0.0
    %1458 = vmatpush2.msra.mxu0 0.0
    %1459 = vmatprep.subr.mxu0 0.0
    %1460 = vmatpush2.msra.mxu0 0.0
    %1461 = vmatprep.subr.mxu0 0.0
    %1462 = vmatpush2.msra.mxu0 0.0
    %1463 = vmatprep.subr.mxu0 0.0
    %1464 = vmatpush2.msra.mxu0 0.0
    %1465 = vmatprep.mubr.f32.mxu0 0.0
    %1466 = vmatmul.mubr.f32.gmra.mxu0 %v1374
    %v1467 = vpop.f32.mrf.mxu0
    %v1468 = vadd.f32 0.0, %v1467
    %v1469 = vpop.f32.mrf.mxu0
    %v1470 = vadd.f32 0.0, %v1469
    %1471 = vdwg.mxu0
    %1472 = vmatprep.subr.mxu0 %v224
    %1473 = vmatpush1.msra.mxu0 %v223
    %1474 = vmatprep.subr.mxu0 %v220
    %1475 = vmatpush1.msra.mxu0 %v219
    %1476 = vmatprep.subr.mxu0 %v216
    %1477 = vmatpush1.msra.mxu0 %v215
    %1478 = vmatprep.subr.mxu0 %v212
    %1479 = vmatpush1.msra.mxu0 %v211
    %1480 = vmatprep.subr.mxu0 %v208
    %1481 = vmatpush1.msra.mxu0 %v207
    %1482 = vmatprep.subr.mxu0 %v204
    %1483 = vmatpush1.msra.mxu0 %v203
    %1484 = vmatprep.subr.mxu0 %v200
    %1485 = vmatpush1.msra.mxu0 %v199
    %1486 = vmatprep.subr.mxu0 %v196
    %1487 = vmatpush1.msra.mxu0 %v195
    %1488 = vmatprep.subr.mxu0 %v192
    %1489 = vmatpush1.msra.mxu0 %v191
    %1490 = vmatprep.subr.mxu0 %v188
    %1491 = vmatpush1.msra.mxu0 %v187
    %1492 = vmatprep.subr.mxu0 %v184
    %1493 = vmatpush1.msra.mxu0 %v183
    %1494 = vmatprep.subr.mxu0 %v180
    %1495 = vmatpush1.msra.mxu0 %v179
    %1496 = vmatprep.subr.mxu0 %v176
    %1497 = vmatpush1.msra.mxu0 %v175
    %1498 = vmatprep.subr.mxu0 %v172
    %1499 = vmatpush1.msra.mxu0 %v171
    %1500 = vmatprep.subr.mxu0 %v168
    %1501 = vmatpush1.msra.mxu0 %v167
    %1502 = vmatprep.subr.mxu0 %v164
    %1503 = vmatpush1.msra.mxu0 %v163
    %1504 = vmatprep.subr.mxu0 0.0
    %1505 = vmatpush2.msra.mxu0 0.0
    %1506 = vmatprep.subr.mxu0 0.0
    %1507 = vmatpush2.msra.mxu0 0.0
    %1508 = vmatprep.subr.mxu0 0.0
    %1509 = vmatpush2.msra.mxu0 0.0
    %1510 = vmatprep.subr.mxu0 0.0
    %1511 = vmatpush2.msra.mxu0 0.0
    %1512 = vmatprep.subr.mxu0 0.0
    %1513 = vmatpush2.msra.mxu0 0.0
    %1514 = vmatprep.subr.mxu0 0.0
    %1515 = vmatpush2.msra.mxu0 0.0
    %1516 = vmatprep.subr.mxu0 0.0
    %1517 = vmatpush2.msra.mxu0 0.0
    %1518 = vmatprep.subr.mxu0 0.0
    %1519 = vmatpush2.msra.mxu0 0.0
    %1520 = vmatprep.subr.mxu0 0.0
    %1521 = vmatpush2.msra.mxu0 0.0
    %1522 = vmatprep.subr.mxu0 0.0
    %1523 = vmatpush2.msra.mxu0 0.0
    %1524 = vmatprep.subr.mxu0 0.0
    %1525 = vmatpush2.msra.mxu0 0.0
    %1526 = vmatprep.subr.mxu0 0.0
    %1527 = vmatpush2.msra.mxu0 0.0
    %1528 = vmatprep.subr.mxu0 0.0
    %1529 = vmatpush2.msra.mxu0 0.0
    %1530 = vmatprep.subr.mxu0 0.0
    %1531 = vmatpush2.msra.mxu0 0.0
    %1532 = vmatprep.subr.mxu0 0.0
    %1533 = vmatpush2.msra.mxu0 0.0
    %1534 = vmatprep.subr.mxu0 0.0
    %1535 = vmatpush2.msra.mxu0 0.0
    %1536 = vmatprep.mubr.f32.mxu0 0.0
    %1537 = vmatmul.mubr.f32.gmra.mxu0 %v1374
    %v1538 = vpop.f32.mrf.mxu0
    %v1539 = vadd.f32 0.0, %v1538
    %v1540 = vpop.f32.mrf.mxu0
    %v1541 = vadd.f32 0.0, %v1540
    %1542 = vdwg.mxu0
    %v1543 = vadd.f32 %v1397, %v1468
    %v1544 = vadd.f32 %v1398, %v1470
    %v1545 = vadd.f32 %v1399, %v1539
    %v1546 = vadd.f32 %v1400, %v1541
    %v1547 = vxor.u32 %v1543, 2147483648
    %v1548 = vxor.u32 %v1544, 2147483648
    %v1549 = vxor.u32 %v1545, 2147483648
    %v1550 = vmul.f32 %v1547, 1.442695
    %v1551 = vpow.pop %v1550
    %v1552 = vmul.f32 %v1548, 1.442695
    %v1553 = vpow.pop %v1552
    %v1554 = vmul.f32 %v1549, 1.442695
    %v1555 = vpow.pop %v1554
    %v1556 = vadd.f32 %v1551, 1.0
    %v1557 = vadd.f32 %v1553, 1.0
    %v1558 = vadd.f32 %v1555, 1.0
    %v1559 = vrcp.pop %v1556
    %v1560 = vmul.f32 1.0, %v1559
    %v1561 = vrcp.pop %v1557
    %v1562 = vmul.f32 1.0, %v1561
    %v1563 = vrcp.pop %v1558
    %v1564 = vmul.f32 1.0, %v1563
    %v1565 = vtanh.pop %v1546
    %v1566 = vmul.f32 %v1562, %v1372
    %v1567 = vmul.f32 %v1560, %v1565
    %v1568 = vadd.f32 %v1566, %v1567
    %v1569 = vtanh.pop %v1568
    %v1570 = vmul.f32 %v1564, %v1569
    %v1571 = vld [vmem:[%s0 + $0x38] sm:$0xff]
    %1573 = vset.pattern.permute.xlu0 0
    %1574 = vperm.xlu0 %1573, %v1571
    %v1575 = vpop.permute.xlu0 %1574
    %v1577 = vmul.f32 %v1575, %v82
    %v1578 = vmul.f32 %v1575, %v86
    %v1579 = vmul.f32 %v1575, %v90
    %v1580 = vmul.f32 %v1575, %v94
    %v1581 = vadd.f32 %v107, %v1577
    %v1582 = vadd.f32 %v111, %v1578
    %v1583 = vadd.f32 %v115, %v1579
    %v1584 = vadd.f32 %v119, %v1580
    %1585 = vset.pattern.permute.xlu0 1
    %1586 = vperm.xlu0 %1585, %v1571
    %v1587 = vpop.permute.xlu0 %1586
    %v1589 = vmul.f32 %v1587, %v136
    %v1590 = vmul.f32 %v1587, %v140
    %v1591 = vmul.f32 %v1587, %v144
    %v1592 = vmul.f32 %v1587, %v148
    %v1593 = vadd.f32 %v1581, %v1589
    %v1594 = vadd.f32 %v1582, %v1590
    %v1595 = vadd.f32 %v1583, %v1591
    %v1596 = vadd.f32 %v1584, %v1592
    %1597 = vmatprep.subr.mxu0 %v222
    %1598 = vmatpush1.msra.mxu0 %v221
    %1599 = vmatprep.subr.mxu0 %v218
    %1600 = vmatpush1.msra.mxu0 %v217
    %1601 = vmatprep.subr.mxu0 %v214
    %1602 = vmatpush1.msra.mxu0 %v213
    %1603 = vmatprep.subr.mxu0 %v210
    %1604 = vmatpush1.msra.mxu0 %v209
    %1605 = vmatprep.subr.mxu0 %v206
    %1606 = vmatpush1.msra.mxu0 %v205
    %1607 = vmatprep.subr.mxu0 %v202
    %1608 = vmatpush1.msra.mxu0 %v201
    %1609 = vmatprep.subr.mxu0 %v198
    %1610 = vmatpush1.msra.mxu0 %v197
    %1611 = vmatprep.subr.mxu0 %v194
    %1612 = vmatpush1.msra.mxu0 %v193
    %1613 = vmatprep.subr.mxu0 %v190
    %1614 = vmatpush1.msra.mxu0 %v189
    %1615 = vmatprep.subr.mxu0 %v186
    %1616 = vmatpush1.msra.mxu0 %v185
    %1617 = vmatprep.subr.mxu0 %v182
    %1618 = vmatpush1.msra.mxu0 %v181
    %1619 = vmatprep.subr.mxu0 %v178
    %1620 = vmatpush1.msra.mxu0 %v177
    %1621 = vmatprep.subr.mxu0 %v174
    %1622 = vmatpush1.msra.mxu0 %v173
    %1623 = vmatprep.subr.mxu0 %v170
    %1624 = vmatpush1.msra.mxu0 %v169
    %1625 = vmatprep.subr.mxu0 %v166
    %1626 = vmatpush1.msra.mxu0 %v165
    %1627 = vmatprep.subr.mxu0 %v162
    %1628 = vmatpush1.msra.mxu0 %v161
    %1629 = vmatprep.subr.mxu0 0.0
    %1630 = vmatpush2.msra.mxu0 0.0
    %1631 = vmatprep.subr.mxu0 0.0
    %1632 = vmatpush2.msra.mxu0 0.0
    %1633 = vmatprep.subr.mxu0 0.0
    %1634 = vmatpush2.msra.mxu0 0.0
    %1635 = vmatprep.subr.mxu0 0.0
    %1636 = vmatpush2.msra.mxu0 0.0
    %1637 = vmatprep.subr.mxu0 0.0
    %1638 = vmatpush2.msra.mxu0 0.0
    %1639 = vmatprep.subr.mxu0 0.0
    %1640 = vmatpush2.msra.mxu0 0.0
    %1641 = vmatprep.subr.mxu0 0.0
    %1642 = vmatpush2.msra.mxu0 0.0
    %1643 = vmatprep.subr.mxu0 0.0
    %1644 = vmatpush2.msra.mxu0 0.0
    %1645 = vmatprep.subr.mxu0 0.0
    %1646 = vmatpush2.msra.mxu0 0.0
    %1647 = vmatprep.subr.mxu0 0.0
    %1648 = vmatpush2.msra.mxu0 0.0
    %1649 = vmatprep.subr.mxu0 0.0
    %1650 = vmatpush2.msra.mxu0 0.0
    %1651 = vmatprep.subr.mxu0 0.0
    %1652 = vmatpush2.msra.mxu0 0.0
    %1653 = vmatprep.subr.mxu0 0.0
    %1654 = vmatpush2.msra.mxu0 0.0
    %1655 = vmatprep.subr.mxu0 0.0
    %1656 = vmatpush2.msra.mxu0 0.0
    %1657 = vmatprep.subr.mxu0 0.0
    %1658 = vmatpush2.msra.mxu0 0.0
    %1659 = vmatprep.subr.mxu0 0.0
    %1660 = vmatpush2.msra.mxu0 0.0
    %1661 = vmatprep.mubr.f32.mxu0 0.0
    %1662 = vmatmul.mubr.f32.gmra.mxu0 %v1570
    %v1663 = vpop.f32.mrf.mxu0
    %v1664 = vadd.f32 0.0, %v1663
    %v1665 = vpop.f32.mrf.mxu0
    %v1666 = vadd.f32 0.0, %v1665
    %1667 = vdwg.mxu0
    %1668 = vmatprep.subr.mxu0 %v224
    %1669 = vmatpush1.msra.mxu0 %v223
    %1670 = vmatprep.subr.mxu0 %v220
    %1671 = vmatpush1.msra.mxu0 %v219
    %1672 = vmatprep.subr.mxu0 %v216
    %1673 = vmatpush1.msra.mxu0 %v215
    %1674 = vmatprep.subr.mxu0 %v212
    %1675 = vmatpush1.msra.mxu0 %v211
    %1676 = vmatprep.subr.mxu0 %v208
    %1677 = vmatpush1.msra.mxu0 %v207
    %1678 = vmatprep.subr.mxu0 %v204
    %1679 = vmatpush1.msra.mxu0 %v203
    %1680 = vmatprep.subr.mxu0 %v200
    %1681 = vmatpush1.msra.mxu0 %v199
    %1682 = vmatprep.subr.mxu0 %v196
    %1683 = vmatpush1.msra.mxu0 %v195
    %1684 = vmatprep.subr.mxu0 %v192
    %1685 = vmatpush1.msra.mxu0 %v191
    %1686 = vmatprep.subr.mxu0 %v188
    %1687 = vmatpush1.msra.mxu0 %v187
    %1688 = vmatprep.subr.mxu0 %v184
    %1689 = vmatpush1.msra.mxu0 %v183
    %1690 = vmatprep.subr.mxu0 %v180
    %1691 = vmatpush1.msra.mxu0 %v179
    %1692 = vmatprep.subr.mxu0 %v176
    %1693 = vmatpush1.msra.mxu0 %v175
    %1694 = vmatprep.subr.mxu0 %v172
    %1695 = vmatpush1.msra.mxu0 %v171
    %1696 = vmatprep.subr.mxu0 %v168
    %1697 = vmatpush1.msra.mxu0 %v167
    %1698 = vmatprep.subr.mxu0 %v164
    %1699 = vmatpush1.msra.mxu0 %v163
    %1700 = vmatprep.subr.mxu0 0.0
    %1701 = vmatpush2.msra.mxu0 0.0
    %1702 = vmatprep.subr.mxu0 0.0
    %1703 = vmatpush2.msra.mxu0 0.0
    %1704 = vmatprep.subr.mxu0 0.0
    %1705 = vmatpush2.msra.mxu0 0.0
    %1706 = vmatprep.subr.mxu0 0.0
    %1707 = vmatpush2.msra.mxu0 0.0
    %1708 = vmatprep.subr.mxu0 0.0
    %1709 = vmatpush2.msra.mxu0 0.0
    %1710 = vmatprep.subr.mxu0 0.0
    %1711 = vmatpush2.msra.mxu0 0.0
    %1712 = vmatprep.subr.mxu0 0.0
    %1713 = vmatpush2.msra.mxu0 0.0
    %1714 = vmatprep.subr.mxu0 0.0
    %1715 = vmatpush2.msra.mxu0 0.0
    %1716 = vmatprep.subr.mxu0 0.0
    %1717 = vmatpush2.msra.mxu0 0.0
    %1718 = vmatprep.subr.mxu0 0.0
    %1719 = vmatpush2.msra.mxu0 0.0
    %1720 = vmatprep.subr.mxu0 0.0
    %1721 = vmatpush2.msra.mxu0 0.0
    %1722 = vmatprep.subr.mxu0 0.0
    %1723 = vmatpush2.msra.mxu0 0.0
    %1724 = vmatprep.subr.mxu0 0.0
    %1725 = vmatpush2.msra.mxu0 0.0
    %1726 = vmatprep.subr.mxu0 0.0
    %1727 = vmatpush2.msra.mxu0 0.0
    %1728 = vmatprep.subr.mxu0 0.0
    %1729 = vmatpush2.msra.mxu0 0.0
    %1730 = vmatprep.subr.mxu0 0.0
    %1731 = vmatpush2.msra.mxu0 0.0
    %1732 = vmatprep.mubr.f32.mxu0 0.0
    %1733 = vmatmul.mubr.f32.gmra.mxu0 %v1570
    %v1734 = vpop.f32.mrf.mxu0
    %v1735 = vadd.f32 0.0, %v1734
    %v1736 = vpop.f32.mrf.mxu0
    %v1737 = vadd.f32 0.0, %v1736
    %1738 = vdwg.mxu0
    %v1739 = vadd.f32 %v1593, %v1664
    %v1740 = vadd.f32 %v1594, %v1666
    %v1741 = vadd.f32 %v1595, %v1735
    %v1742 = vadd.f32 %v1596, %v1737
    %v1743 = vxor.u32 %v1739, 2147483648
    %v1744 = vxor.u32 %v1740, 2147483648
    %v1745 = vxor.u32 %v1741, 2147483648
    %v1746 = vmul.f32 %v1743, 1.442695
    %v1747 = vpow.pop %v1746
    %v1748 = vmul.f32 %v1744, 1.442695
    %v1749 = vpow.pop %v1748
    %v1750 = vmul.f32 %v1745, 1.442695
    %v1751 = vpow.pop %v1750
    %v1752 = vadd.f32 %v1747, 1.0
    %v1753 = vadd.f32 %v1749, 1.0
    %v1754 = vadd.f32 %v1751, 1.0
    %v1755 = vrcp.pop %v1752
    %v1756 = vmul.f32 1.0, %v1755
    %v1757 = vrcp.pop %v1753
    %v1758 = vmul.f32 1.0, %v1757
    %v1759 = vrcp.pop %v1754
    %v1760 = vmul.f32 1.0, %v1759
    %v1761 = vtanh.pop %v1742
    %v1762 = vmul.f32 %v1758, %v1568
    %v1763 = vmul.f32 %v1756, %v1761
    %v1764 = vadd.f32 %v1762, %v1763
    %v1765 = vtanh.pop %v1764
    %v1766 = vmul.f32 %v1760, %v1765
    %v1767 = vld [vmem:[%s6] sm:$0xff]
    %v1768 = vld [vmem:[%s6 + $0x8] sm:$0xff]
    %v1769 = vld [vmem:[%s6 + $0x10] sm:$0xff]
    %v1770 = vld [vmem:[%s6 + $0x18] sm:$0xff]
    %v1771 = vld [vmem:[%s6 + $0x20] sm:$0xff]
    %v1772 = vld [vmem:[%s6 + $0x28] sm:$0xff]
    %v1773 = vld [vmem:[%s6 + $0x30] sm:$0xff]
    %v1774 = vld [vmem:[%s6 + $0x38] sm:$0xff]
    %v1775 = vld [vmem:[%s6 + $0x40] sm:$0xff]
    %v1776 = vld [vmem:[%s6 + $0x48] sm:$0xff]
    %v1777 = vld [vmem:[%s6 + $0x50] sm:$0xff]
    %v1778 = vld [vmem:[%s6 + $0x58] sm:$0xff]
    %v1779 = vld [vmem:[%s6 + $0x60] sm:$0xff]
    %v1780 = vld [vmem:[%s6 + $0x68] sm:$0xff]
    %v1781 = vld [vmem:[%s6 + $0x70] sm:$0xff]
    %v1782 = vld [vmem:[%s6 + $0x78] sm:$0xff]
    %v1783 = vld [vmem:[#allocation6] sm:$0x1]
    %v1785 = vlaneseq
    %v1786 = vshrl.u32 %v1785, 7
    %v1787 = vsub.s32 0, %v1786
    %v1788 = vrot.slane %v1783, %v1787
    %1790 = vmatprep.subr.mxu0 0.0
    %1791 = vmatpush1.msra.mxu0 %v1782
    %1792 = vmatprep.subr.mxu0 0.0
    %1793 = vmatpush1.msra.mxu0 %v1781
    %1794 = vmatprep.subr.mxu0 0.0
    %1795 = vmatpush1.msra.mxu0 %v1780
    %1796 = vmatprep.subr.mxu0 0.0
    %1797 = vmatpush1.msra.mxu0 %v1779
    %1798 = vmatprep.subr.mxu0 0.0
    %1799 = vmatpush1.msra.mxu0 %v1778
    %1800 = vmatprep.subr.mxu0 0.0
    %1801 = vmatpush1.msra.mxu0 %v1777
    %1802 = vmatprep.subr.mxu0 0.0
    %1803 = vmatpush1.msra.mxu0 %v1776
    %1804 = vmatprep.subr.mxu0 0.0
    %1805 = vmatpush1.msra.mxu0 %v1775
    %1806 = vmatprep.subr.mxu0 0.0
    %1807 = vmatpush1.msra.mxu0 %v1774
    %1808 = vmatprep.subr.mxu0 0.0
    %1809 = vmatpush1.msra.mxu0 %v1773
    %1810 = vmatprep.subr.mxu0 0.0
    %1811 = vmatpush1.msra.mxu0 %v1772
    %1812 = vmatprep.subr.mxu0 0.0
    %1813 = vmatpush1.msra.mxu0 %v1771
    %1814 = vmatprep.subr.mxu0 0.0
    %1815 = vmatpush1.msra.mxu0 %v1770
    %1816 = vmatprep.subr.mxu0 0.0
    %1817 = vmatpush1.msra.mxu0 %v1769
    %1818 = vmatprep.subr.mxu0 0.0
    %1819 = vmatpush1.msra.mxu0 %v1768
    %1820 = vmatprep.subr.mxu0 0.0
    %1821 = vmatpush1.msra.mxu0 %v1767
    %1822 = vmatprep.subr.mxu0 0.0
    %1823 = vmatpush2.msra.mxu0 0.0
    %1824 = vmatprep.subr.mxu0 0.0
    %1825 = vmatpush2.msra.mxu0 0.0
    %1826 = vmatprep.subr.mxu0 0.0
    %1827 = vmatpush2.msra.mxu0 0.0
    %1828 = vmatprep.subr.mxu0 0.0
    %1829 = vmatpush2.msra.mxu0 0.0
    %1830 = vmatprep.subr.mxu0 0.0
    %1831 = vmatpush2.msra.mxu0 0.0
    %1832 = vmatprep.subr.mxu0 0.0
    %1833 = vmatpush2.msra.mxu0 0.0
    %1834 = vmatprep.subr.mxu0 0.0
    %1835 = vmatpush2.msra.mxu0 0.0
    %1836 = vmatprep.subr.mxu0 0.0
    %1837 = vmatpush2.msra.mxu0 0.0
    %1838 = vmatprep.subr.mxu0 0.0
    %1839 = vmatpush2.msra.mxu0 0.0
    %1840 = vmatprep.subr.mxu0 0.0
    %1841 = vmatpush2.msra.mxu0 0.0
    %1842 = vmatprep.subr.mxu0 0.0
    %1843 = vmatpush2.msra.mxu0 0.0
    %1844 = vmatprep.subr.mxu0 0.0
    %1845 = vmatpush2.msra.mxu0 0.0
    %1846 = vmatprep.subr.mxu0 0.0
    %1847 = vmatpush2.msra.mxu0 0.0
    %1848 = vmatprep.subr.mxu0 0.0
    %1849 = vmatpush2.msra.mxu0 0.0
    %1850 = vmatprep.subr.mxu0 0.0
    %1851 = vmatpush2.msra.mxu0 0.0
    %1852 = vmatprep.subr.mxu0 0.0
    %1853 = vmatpush2.msra.mxu0 0.0
    %1854 = vmatprep.mubr.f32.mxu0 0.0
    %1855 = vmatmul.mubr.f32.gmra.mxu0 %v1766
    %v1856 = vpop.f32.mrf.mxu0
    %v1857 = vadd.f32 %v1788, %v1856
    %v1858 = vpop.f32.mrf.mxu0
    %1859 = vdwg.mxu0
    %1860 = vst [vmem:[%s8] sm:$0xff] %v1857
    // Predicated region
    $region46: #{_forward.1} parent=1 // pred_check
      _
    $region47: #{_forward.1} parent=1 // pred_check_branch
      %1862 = sbr.rel (0) target = $region49
    $region48: #{_forward.1} parent=1 // pred_region
      _
    $region49: #{_forward.1} parent=1 // pred_fallthru
      _
    // Predicated region
    $region50: #{_forward.1} parent=1 // pred_check
      _
    $region51: #{_forward.1} parent=1 // pred_check_branch
      %1864 = sbr.rel (0) target = $region53
    $region52: #{_forward.1} parent=1 // pred_region
      _
    $region53: #{_forward.1} parent=1 // pred_fallthru
      _
    %1865 = vsyncpa [#allocation3], 1
    %1866 = vsyncpa [#allocation5], 1

</llo_original>
